<compile_context>
chip_gen: v6e
topology: v6e:2x2x1
jax: 0.10.0
libtpu: 0.0.40
codegen_flags: <defaults>
</compile_context>

<pallas_src>
import math
import functools

import numpy as np
import jax
import jax.numpy as jnp
from jax import lax
from jax.experimental import pallas as pl
from jax.experimental.pallas import tpu as pltpu


# ----------------------------------------------------------------------------
# One-time probe: determine pltpu.roll's rotation convention on this backend
# (or fall back to concat-based shifts if roll is unavailable).
# ----------------------------------------------------------------------------
_ROLL_MODE_CACHE = []


def _roll_mode():
    if _ROLL_MODE_CACHE:
        return _ROLL_MODE_CACHE[0]
    mode = "concat"
    try:
        def probe(x_ref, o_ref):
            o_ref[...] = pltpu.roll(x_ref[...], 1, 1)

        n = 128
        x = jnp.broadcast_to(jnp.arange(n, dtype=jnp.int32), (8, n))
        out = pl.pallas_call(
            probe, out_shape=jax.ShapeDtypeStruct((8, n), jnp.int32))(x)
        first = int(jax.device_get(out)[0, 0])
        if first == n - 1:
            mode = "np"        # out[p] = in[p - shift]   (np.roll semantics)
        elif first == 1:
            mode = "flipped"   # out[p] = in[p + shift]
    except Exception:
        mode = "concat"        # pltpu.roll unusable -> concat shifts
    _ROLL_MODE_CACHE.append(mode)
    return mode


# ----------------------------------------------------------------------------
# Kernel 1: RMSNorm + QKV projection + RoPE + head split   grid = (B, seqTiles)
# ----------------------------------------------------------------------------
def qkv_rope_kernel(x_ref, win_ref, anw_ref, cos_ref, sin_ref,
                    q_ref, k_ref, v_ref,
                    *, emb_dim, nb_heads, head_dim, eps, roll_mode):
    E = emb_dim
    x = x_ref[...].astype(jnp.float32)                    # (ts, E)

    # RMSNorm in f32; cast to bf16 only at the matmul boundary.
    var = jnp.mean(x * x, axis=-1, keepdims=True)
    h = (x * lax.rsqrt(var + eps) * anw_ref[...]).astype(jnp.bfloat16)

    qkv = jnp.dot(h, win_ref[...], preferred_element_type=jnp.float32)  # (ts, 3E)

    cos = cos_ref[...]                                     # (ts, E)
    sin_signed = sin_ref[...]                              # (ts, E): -sin even / +sin odd
    even = (lax.broadcasted_iota(jnp.int32, cos.shape, 1) % 2) == 0

    def pair_partner(t):
        # where(even, t[:, p+1], t[:, p-1]) -- the interleaved-RoPE pair partner.
        if roll_mode == "np":
            t_next = pltpu.roll(t, E - 1, 1)               # non-negative shifts only
            t_prev = pltpu.roll(t, 1, 1)
        elif roll_mode == "flipped":
            t_next = pltpu.roll(t, 1, 1)
            t_prev = pltpu.roll(t, E - 1, 1)
        else:                                              # concat fallback
            t_next = jnp.concatenate([t[:, 1:], t[:, :1]], axis=1)
            t_prev = jnp.concatenate([t[:, -1:], t[:, :-1]], axis=1)
        return jnp.where(even, t_next, t_prev)

    def rope(t):
        #   out[2c]   = t[2c]*cos_c - t[2c+1]*sin_c
        #   out[2c+1] = t[2c]*sin_c + t[2c+1]*cos_c
        return t * cos + pair_partner(t) * sin_signed

    scale = 1.0 / math.sqrt(head_dim)                      # folded here (review item)
    q = rope(qkv[:, :E]) * scale
    k = rope(qkv[:, E:2 * E])
    v = qkv[:, 2 * E:]

    # Head split into the heads-leading layout.  Static lane slices -- paid once
    # here instead of once per (q_tile, kv_tile) step in the attention kernel.
    for hh in range(nb_heads):
        lo = hh * head_dim
        q_ref[hh] = q[:, lo:lo + head_dim].astype(q_ref.dtype)
        k_ref[hh] = k[:, lo:lo + head_dim].astype(k_ref.dtype)
        v_ref[hh] = v[:, lo:lo + head_dim].astype(v_ref.dtype)


# ----------------------------------------------------------------------------
# Kernel 2: flash attention + per-head W_out partial sums + residual
#           grid = (B, qTiles, kvTiles)   (kv axis = reduction)
# ----------------------------------------------------------------------------
def attn_kernel(x_ref, q_ref, k_ref, v_ref, wout_ref, o_ref,
                m_ref, l_ref, acc_ref,
                *, nb_heads, head_dim, emb_dim, tq, tk):
    qi = pl.program_id(1)
    ki = pl.program_id(2)
    nk = pl.num_programs(2)
    NEG = -1e30                         # big-finite mask value: no inf-inf NaNs

    @pl.when(ki == 0)
    def _init():
        m_ref[...] = jnp.full_like(m_ref, NEG)
        l_ref[...] = jnp.zeros_like(l_ref)
        acc_ref[...] = jnp.zeros_like(acc_ref)

    # With tq == tk a KV tile is causally live iff ki <= qi (the clamped k/v
    # index_maps elide the DMA for the dead tiles as well).
    @pl.when(ki <= qi)
    def _compute():
        rows = qi * tq + lax.broadcasted_iota(jnp.int32, (tq, tk), 0)
        cols = ki * tk + lax.broadcasted_iota(jnp.int32, (tq, tk), 1)
        causal = cols <= rows
        dn = (((1,), (1,)), ((), ()))            # q @ k^T without materializing k.T

        def per_head(h, carry):
            qh = q_ref[h]                        # (tq, hd) bf16, scale pre-folded
            kh = k_ref[h]                        # (tk, hd) bf16
            vh = v_ref[h]                        # (tk, hd) bf16
            s = lax.dot_general(qh, kh, dn, preferred_element_type=jnp.float32)
            s = jnp.where(causal, s, NEG)

            m_prev = m_ref[h]                    # (tq, 1)
            m_new = jnp.maximum(m_prev, jnp.max(s, axis=-1, keepdims=True))
            alpha = jnp.exp(m_prev - m_new)
            p = jnp.exp(s - m_new)
            l_ref[h] = alpha * l_ref[h] + jnp.sum(p, axis=-1, keepdims=True)
            acc_ref[h] = alpha * acc_ref[h] + jnp.dot(
                p.astype(vh.dtype), vh, preferred_element_type=jnp.float32)
            m_ref[h] = m_new
            return carry

        lax.fori_loop(0, nb_heads, per_head, None)

    # Last KV step: normalize per head, project with the matching W_out row
    # block (per-head partial sums -- no lane-dense z rebuild), add residual.
    @pl.when(ki == nk - 1)
    def _finalize():
        def head_out(h, partial):
            zh = acc_ref[h] * pl.reciprocal(l_ref[h], approx=True)   # (tq, hd)
            return partial + jnp.dot(zh.astype(jnp.bfloat16), wout_ref[h],
                                     preferred_element_type=jnp.float32)

        attn = lax.fori_loop(0, nb_heads, head_out,
                             jnp.zeros((tq, emb_dim), jnp.float32))
        o_ref[...] = (x_ref[...].astype(jnp.float32) + attn).astype(o_ref.dtype)


# ----------------------------------------------------------------------------
# Kernel 3: RMSNorm + SwiGLU FFN (hidden-dim streamed) + residual
#           grid = (B, seqTiles, hiddenTiles)   (hidden axis = reduction)
# ----------------------------------------------------------------------------
def ffn_kernel(x1_ref, fnw_ref, w1_ref, w3_ref, w2_ref, o_ref,
               h2_ref, acc_ref, *, eps):
    j = pl.program_id(2)
    nh = pl.num_programs(2)

    @pl.when(j == 0)
    def _init():
        x1 = x1_ref[...].astype(jnp.float32)
        var = jnp.mean(x1 * x1, axis=-1, keepdims=True)
        h2_ref[...] = (x1 * lax.rsqrt(var + eps) * fnw_ref[...]).astype(h2_ref.dtype)
        acc_ref[...] = jnp.zeros_like(acc_ref)

    h2 = h2_ref[...]                                           # (ts, E) bf16
    g = jnp.dot(h2, w1_ref[...], preferred_element_type=jnp.float32)
    u = jnp.dot(h2, w3_ref[...], preferred_element_type=jnp.float32)
    act = (g * jax.nn.sigmoid(g) * u).astype(jnp.bfloat16)     # silu(g) * u
    acc_ref[...] += jnp.dot(act, w2_ref[...], preferred_element_type=jnp.float32)

    @pl.when(j == nh - 1)
    def _fin():
        o_ref[...] = (x1_ref[...].astype(jnp.float32)
                      + acc_ref[...]).astype(o_ref.dtype)


# ----------------------------------------------------------------------------
# Wrapper
# ----------------------------------------------------------------------------
def _rope_tables(seq_len, emb_dim, head_dim, theta):
    """(S, E) cos table and signed-sin table (interleaved torch RoPE layout).

    Matches the torch module exactly: angle = position * 2*pi * theta^(-2k/d).
    """
    freqs = 1.0 / theta ** (np.arange(0, head_dim - 1, 2, dtype=np.float64) / head_dim)
    t = np.arange(seq_len, dtype=np.float64) * 2.0 * math.pi
    ang = np.outer(t, freqs)                                   # (S, hd // 2)
    cos, sin = np.cos(ang), np.sin(ang)
    pair = (np.arange(emb_dim) % head_dim) // 2                # channel -> rope pair
    cos_full = cos[:, pair]                                    # (S, E)
    sin_full = sin[:, pair]                                    # (S, E)
    sign = np.where(np.arange(emb_dim) % 2 == 0, -1.0, 1.0)[None, :]
    return (jnp.asarray(cos_full, jnp.float32),
            jnp.asarray(sin_full * sign, jnp.float32))


def _seq_tile(seq_len, override=None):
    if override is not None:
        assert seq_len % override == 0
        return override
    # Larger tiles ride HBM bandwidth better (v5e/v6e want 256-512 at prod).
    for t in (512, 256, 128, 64, 32, 16, 8):
        if seq_len >= t and seq_len % t == 0:
            return t
    return seq_len


def _hidden_tile(hidden, override=None):
    if override is not None:
        assert hidden % override == 0
        return override
    for t in (512, 256, 128):
        if hidden % t == 0:
            return t
    return hidden


def transformer_block(x, params, *, nb_heads, rope_theta, eps,
                      seq_tile=None, hidden_tile=None,
                      vmem_limit_bytes=48 * 1024 * 1024,
                      single_buffer_weights=True):
    B, S, E = x.shape
    assert E % nb_heads == 0
    head_dim = E // nb_heads
    hidden = params["W1"].shape[0]

    wdt = jnp.bfloat16
    win_t = jnp.asarray(params["W_in"]).T.astype(wdt)                  # (E, 3E)
    wout_r = jnp.asarray(params["W_out"]).T.astype(wdt).reshape(
        nb_heads, head_dim, E)                                         # (H, hd, E)
    w1_t = jnp.asarray(params["W1"]).T.astype(wdt)                     # (E, hid)
    w3_t = jnp.asarray(params["W3"]).T.astype(wdt)                     # (E, hid)
    w2_t = jnp.asarray(params["W2"]).T.astype(wdt)                     # (hid, E)
    anw = jnp.asarray(params["attn_norm"], jnp.float32).reshape(1, E)
    fnw = jnp.asarray(params["ffn_norm"], jnp.float32).reshape(1, E)
    cos_f, sin_f = _rope_tables(S, E, head_dim, rope_theta)

    ts = _seq_tile(S, seq_tile)
    tq = tk = ts                 # causal-skip / DMA-elision logic assumes tq == tk
    th = _hidden_tile(hidden, hidden_tile)
    n_s = S // ts
    n_h = hidden // th
    roll_mode = _roll_mode()
    itemsize = int(x.dtype.itemsize)

    def wspec(shape, index_map):
        # Constant-index weights: single-buffer to halve their VMEM footprint.
        if single_buffer_weights:
            return pl.BlockSpec(shape, index_map,
                                pipeline_mode=pl.Buffered(buffer_count=1))
        return pl.BlockSpec(shape, index_map)

    # ------------------- kernel 1: RMSNorm + QKV + RoPE ----------------------
    kern1 = functools.partial(qkv_rope_kernel, emb_dim=E, nb_heads=nb_heads,
                              head_dim=head_dim, eps=eps, roll_mode=roll_mode)
    qkv_sds = jax.ShapeDtypeStruct((B, nb_heads, S, head_dim), jnp.bfloat16)
    ce1 = pl.CostEstimate(
        flops=int(2 * B * S * E * 3 * E),
        transcendentals=0,
        bytes_accessed=int(B * S * E * itemsize + E * 3 * E * 2
                           + 2 * S * E * 4 + 3 * B * S * E * 2))
    q, k, v = pl.pallas_call(
        kern1,
        out_shape=(qkv_sds, qkv_sds, qkv_sds),
        grid_spec=pltpu.PrefetchScalarGridSpec(
            num_scalar_prefetch=0,
            grid=(B, n_s),
            in_specs=[
                pl.BlockSpec((None, ts, E), lambda b, si: (b, si, 0)),     # x
                wspec((E, 3 * E), lambda b, si: (0, 0)),                   # W_in^T
                wspec((1, E), lambda b, si: (0, 0)),                       # attn_norm
                pl.BlockSpec((ts, E), lambda b, si: (si, 0)),              # cos
                pl.BlockSpec((ts, E), lambda b, si: (si, 0)),              # signed sin
            ],
            out_specs=[pl.BlockSpec((None, nb_heads, ts, head_dim),
                                    lambda b, si: (b, 0, si, 0))] * 3,
        ),
        compiler_params=pltpu.CompilerParams(
            dimension_semantics=("parallel", "parallel"),
            vmem_limit_bytes=vmem_limit_bytes),
        cost_estimate=ce1,
    )(x, win_t, anw, cos_f, sin_f)

    # ------------- kernel 2: flash attention + W_out + residual --------------
    kern2 = functools.partial(attn_kernel, nb_heads=nb_heads, head_dim=head_dim,
                              emb_dim=E, tq=tq, tk=tk)
    kv_map = lambda b, qi, ki: (b, 0, jnp.minimum(ki, qi), 0)   # elide dead-tile DMAs
    ce2 = pl.CostEstimate(
        flops=int(2 * B * S * S * E + 2 * B * S * E * E),
        transcendentals=int(B * nb_heads * S * S // 2),
        bytes_accessed=int(2 * B * S * E * itemsize + B * S * E * 2
                           + 2 * B * S * E * 2 * n_s + E * E * 2))
    x1 = pl.pallas_call(
        kern2,
        out_shape=jax.ShapeDtypeStruct((B, S, E), x.dtype),
        grid_spec=pltpu.PrefetchScalarGridSpec(
            num_scalar_prefetch=0,
            grid=(B, n_s, n_s),
            in_specs=[
                pl.BlockSpec((None, tq, E), lambda b, qi, ki: (b, qi, 0)),          # x
                pl.BlockSpec((None, nb_heads, tq, head_dim),
                             lambda b, qi, ki: (b, 0, qi, 0)),                       # q
                pl.BlockSpec((None, nb_heads, tk, head_dim), kv_map),                # k
                pl.BlockSpec((None, nb_heads, tk, head_dim), kv_map),                # v
                wspec((nb_heads, head_dim, E), lambda b, qi, ki: (0, 0, 0)),         # W_out
            ],
            out_specs=pl.BlockSpec((None, tq, E), lambda b, qi, ki: (b, qi, 0)),
            scratch_shapes=[
                # (H, tq, 1) pads lanes to 128 (minor VMEM waste) but keeps the
                # fori_loop head index on the leading axis.
                pltpu.VMEM((nb_heads, tq, 1), jnp.float32),     # running max
                pltpu.VMEM((nb_heads, tq, 1), jnp.float32),     # running sum
                pltpu.VMEM((nb_heads, tq, head_dim), jnp.float32),  # per-head acc
            ]),
        compiler_params=pltpu.CompilerParams(
            dimension_semantics=("parallel", "parallel", "arbitrary"),
            vmem_limit_bytes=vmem_limit_bytes),
        cost_estimate=ce2,
    )(x, q, k, v, wout_r)

    # ----------- kernel 3: RMSNorm + SwiGLU FFN (hidden-streamed) ------------
    kern3 = functools.partial(ffn_kernel, eps=eps)
    ce3 = pl.CostEstimate(
        flops=int(6 * B * S * E * hidden),
        transcendentals=int(B * S * hidden),
        bytes_accessed=int(2 * B * S * E * itemsize
                           + 3 * E * hidden * 2 * B * n_s))
    out = pl.pallas_call(
        kern3,
        out_shape=jax.ShapeDtypeStruct((B, S, E), x.dtype),
        grid_spec=pltpu.PrefetchScalarGridSpec(
            num_scalar_prefetch=0,
            grid=(B, n_s, n_h),
            in_specs=[
                pl.BlockSpec((None, ts, E), lambda b, si, j: (b, si, 0)),   # x1
                wspec((1, E), lambda b, si, j: (0, 0)),                     # ffn_norm
                pl.BlockSpec((E, th), lambda b, si, j: (0, j)),             # W1^T tile
                pl.BlockSpec((E, th), lambda b, si, j: (0, j)),             # W3^T tile
                pl.BlockSpec((th, E), lambda b, si, j: (j, 0)),             # W2^T tile
            ],
            out_specs=pl.BlockSpec((None, ts, E), lambda b, si, j: (b, si, 0)),
            scratch_shapes=[
                pltpu.VMEM((ts, E), jnp.bfloat16),   # normalized activations
                pltpu.VMEM((ts, E), jnp.float32),    # FFN accumulator
            ]),
        compiler_params=pltpu.CompilerParams(
            dimension_semantics=("parallel", "parallel", "arbitrary"),
            vmem_limit_bytes=vmem_limit_bytes),
        cost_estimate=ce3,
    )(x1, fnw, w1_t, w3_t, w2_t)
    return out


# ----------------------------------------------------------------------------
# Pure-JAX reference mirroring the torch module (interleaved RoPE).
# matmul_dtype=bfloat16 mirrors the kernel's bf16-operand / f32-accum MXU
# precision so the comparison isolates algorithmic errors.
# ----------------------------------------------------------------------------
def _rope_base(seq_len, head_dim, theta):
    freqs = 1.0 / theta ** (np.arange(0, head_dim - 1, 2, dtype=np.float64) / head_dim)
    t = np.arange(seq_len, dtype=np.float64) * 2.0 * math.pi
    ang = np.outer(t, freqs)
    return (jnp.asarray(np.cos(ang), jnp.float32),
            jnp.asarray(np.sin(ang), jnp.float32))


def reference_block(x, params, *, nb_heads, rope_theta, eps, matmul_dtype=None):
    B, S, E = x.shape
    hd = E // nb_heads

    def cast(t):
        return t if matmul_dtype is None else t.astype(matmul_dtype)

    def rms(h, w):
        return h * lax.rsqrt(jnp.mean(h * h, -1, keepdims=True) + eps) * w

    h = rms(x, params["attn_norm"])
    qkv = jnp.dot(cast(h), cast(params["W_in"].T),
                  preferred_element_type=jnp.float32)
    q, k, v = jnp.split(qkv, 3, axis=-1)
    to_heads = lambda t: t.reshape(B, S, nb_heads, hd).transpose(0, 2, 1, 3)
    q, k, v = to_heads(q), to_heads(k), to_heads(v)

    cos, sin = _rope_base(S, hd, rope_theta)

    def rope(t):
        t = t.reshape(B, nb_heads, S, hd // 2, 2)
        re = t[..., 0] * cos - t[..., 1] * sin
        im = t[..., 0] * sin + t[..., 1] * cos
        return jnp.stack([re, im], axis=-1).reshape(B, nb_heads, S, hd)

    q, k, v = cast(rope(q)), cast(rope(k)), cast(v)
    s = jnp.einsum('bhqd,bhkd->bhqk', q, k,
                   preferred_element_type=jnp.float32) / math.sqrt(hd)
    mask = np.tril(np.ones((S, S), dtype=bool))
    s = jnp.where(mask, s, -jnp.inf)
    p = jax.nn.softmax(s, axis=-1)
    z = jnp.einsum('bhqk,bhkd->bhqd', cast(p), v,
                   preferred_element_type=jnp.float32)
    z = z.transpose(0, 2, 1, 3).reshape(B, S, E)
    x1 = x + jnp.dot(cast(z), cast(params["W_out"].T),
                     preferred_element_type=jnp.float32)

    h2 = rms(x1, params["ffn_norm"])
    g = jnp.dot(cast(h2), cast(params["W1"].T), preferred_element_type=jnp.float32)
    u = jnp.dot(cast(h2), cast(params["W3"].T), preferred_element_type=jnp.float32)
    act = jax.nn.silu(g) * u
    return x1 + jnp.dot(cast(act), cast(params["W2"].T),
                        preferred_element_type=jnp.float32)


# ----------------------------------------------------------------------------
if __name__ == "__main__":
    # Small but layout-friendly shapes: E = 128 keeps every lane dim a multiple
    # of 128; seq_tile=16 / hidden_tile=128 exercise the kv-reduction, the
    # causal DMA elision, and the hidden-dim streaming paths.
    B, S, E, H, HID = 2, 32, 128, 4, 256
    THETA, EPS = 10000.0, 1e-5

    key = jax.random.PRNGKey(0)
    ks = jax.random.split(key, 8)
    std = E ** -0.5
    params = {
        "W_in":  (std * jax.random.normal(ks[0], (3 * E, E))).astype(jnp.float32),
        "W_out": (std * jax.random.normal(ks[1], (E, E))).astype(jnp.float32),
        "W1":    (std * jax.random.normal(ks[2], (HID, E))).astype(jnp.float32),
        "W3":    (std * jax.random.normal(ks[3], (HID, E))).astype(jnp.float32),
        "W2":    (std * jax.random.normal(ks[4], (E, HID))).astype(jnp.float32),
        "attn_norm": (1.0 + 0.1 * jax.random.normal(ks[5], (E,))).astype(jnp.float32),
        "ffn_norm":  (1.0 + 0.1 * jax.random.normal(ks[6], (E,))).astype(jnp.float32),
    }
    x = jax.random.normal(ks[7], (B, S, E), dtype=jnp.float32)

    run = functools.partial(transformer_block, x, params, nb_heads=H,
                            rope_theta=THETA, eps=EPS,
                            seq_tile=16, hidden_tile=128)
    try:
        out = jax.block_until_ready(run(single_buffer_weights=True))
    except Exception:
        # This JAX build rejects BlockSpec(pipeline_mode=pl.Buffered(1));
        # fall back to default double-buffered weights.
        out = jax.block_until_ready(run(single_buffer_weights=False))

    # Compare against the precision-mirrored reference (bf16 MXU operands,
    # f32 accumulation) to isolate algorithmic correctness.
    ref = reference_block(x, params, nb_heads=H, rope_theta=THETA, eps=EPS,
                          matmul_dtype=jnp.bfloat16)
    np.testing.assert_allclose(np.asarray(out), np.asarray(ref),
                               rtol=3e-2, atol=3e-2)

    print("KERNEL_OK")
</pallas_src>

<mosaic_0001>
module attributes {stable_mosaic.version = 11 : i64} {
  func.func @probe(%arg0: memref<8x128xi32, #tpu.memory_space<vmem>>, %arg1: memref<8x128xi32, #tpu.memory_space<vmem>>) attributes {dimension_semantics = [], scalar_prefetch = 0 : i64, scratch_operands = 0 : i64, tpu.core_type = #tpu.core_type<tc>} {
    %c0 = arith.constant 0 : index
    %c0_0 = arith.constant 0 : index
    %0 = vector.load %arg0[%c0, %c0_0] : memref<8x128xi32, #tpu.memory_space<vmem>>, vector<8x128xi32>
    %c1_i32 = arith.constant 1 : i32
    %1 = tpu.dynamic_rotate %0 by %c1_i32 dim 1 : vector<8x128xi32>, i32 -> vector<8x128xi32>
    %c0_1 = arith.constant 0 : index
    %c0_2 = arith.constant 0 : index
    %2 = vector.load %arg1[%c0_1, %c0_2] : memref<8x128xi32, #tpu.memory_space<vmem>>, vector<8x128xi32>
    tpu.vector_store %arg1[%c0_1, %c0_2], %1 {strides = array<i32>} : memref<8x128xi32, #tpu.memory_space<vmem>>, vector<8x128xi32>,
    return
  }
}

module attributes {stable_mosaic.version = 11 : i64} {
  func.func @qkv_rope_kernel(%arg0: i32, %arg1: i32, %arg2: memref<1x16x128xf32, #tpu.memory_space<vmem>>, %arg3: memref<128x384xbf16, #tpu.memory_space<vmem>>, %arg4: memref<1x128xf32, #tpu.memory_space<vmem>>, %arg5: memref<16x128xf32, #tpu.memory_space<vmem>>, %arg6: memref<16x128xf32, #tpu.memory_space<vmem>>, %arg7: memref<1x4x16x32xbf16, #tpu.memory_space<vmem>>, %arg8: memref<1x4x16x32xbf16, #tpu.memory_space<vmem>>, %arg9: memref<1x4x16x32xbf16, #tpu.memory_space<vmem>>) attributes {dimension_semantics = [#tpu.dimension_semantics<parallel>, #tpu.dimension_semantics<parallel>], iteration_bounds = array<i64: 2, 2>, scalar_prefetch = 0 : i64, scratch_operands = 0 : i64, tpu.core_type = #tpu.core_type<tc>, window_params = [{transform_indices = @transform_0, window_bounds = array<i64: 1, 16, 128>}, {pipeline_mode = #tpu.pipeline_mode<synchronous>, transform_indices = @transform_1, window_bounds = array<i64: 128, 384>}, {pipeline_mode = #tpu.pipeline_mode<synchronous>, transform_indices = @transform_2, window_bounds = array<i64: 1, 128>}, {transform_indices = @transform_3, window_bounds = array<i64: 16, 128>}, {transform_indices = @transform_4, window_bounds = array<i64: 16, 128>}, {transform_indices = @transform_5, window_bounds = array<i64: 1, 4, 16, 32>}, {transform_indices = @transform_6, window_bounds = array<i64: 1, 4, 16, 32>}, {transform_indices = @transform_7, window_bounds = array<i64: 1, 4, 16, 32>}]} {
    %c0 = arith.constant 0 : index
    %c0_0 = arith.constant 0 : index
    %c0_1 = arith.constant 0 : index
    %0 = vector.load %arg2[%c0, %c0_0, %c0_1] : memref<1x16x128xf32, #tpu.memory_space<vmem>>, vector<1x16x128xf32>
    %1 = vector.shape_cast %0 : vector<1x16x128xf32> to vector<16x128xf32>
    %2 = arith.mulf %1, %1 : vector<16x128xf32>
    %cst = arith.constant dense<0.000000e+00> : vector<16xf32>
    %3 = vector.multi_reduction <add>, %2, %cst [1] : vector<16x128xf32> to vector<16xf32>
    %4 = vector.shape_cast %3 : vector<16xf32> to vector<16x1xf32>
    %cst_2 = arith.constant 1.280000e+02 : f32
    %5 = vector.broadcast %cst_2 : f32 to vector<16x1xf32>
    %6 = arith.divf %4, %5 : vector<16x1xf32>
    %cst_3 = arith.constant 9.99999974E-6 : f32
    %7 = vector.broadcast %cst_3 : f32 to vector<16x1xf32>
    %8 = arith.addf %6, %7 : vector<16x1xf32>
    %9 = math.rsqrt %8 : vector<16x1xf32>
    %10 = vector.broadcast %9 : vector<16x1xf32> to vector<16x128xf32>
    %11 = arith.mulf %1, %10 : vector<16x128xf32>
    %c0_4 = arith.constant 0 : index
    %c0_5 = arith.constant 0 : index
    %12 = vector.load %arg4[%c0_4, %c0_5] : memref<1x128xf32, #tpu.memory_space<vmem>>, vector<1x128xf32>
    %13 = vector.broadcast %12 : vector<1x128xf32> to vector<16x128xf32>
    %14 = arith.mulf %11, %13 : vector<16x128xf32>
    %15 = arith.truncf %14 : vector<16x128xf32> to vector<16x128xbf16>
    %c0_6 = arith.constant 0 : index
    %c0_7 = arith.constant 0 : index
    %16 = vector.load %arg3[%c0_6, %c0_7] : memref<128x384xbf16, #tpu.memory_space<vmem>>, vector<128x384xbf16>
    %cst_8 = arith.constant dense<0.000000e+00> : vector<16x384xf32>
    %17 = tpu.matmul %15, %16, %cst_8 {dimension_numbers = #tpu.dot_dimension_numbers<[1], [0], [0], [1], [0, 0, 1, 1], [], []>} : vector<16x128xbf16>, vector<128x384xbf16>, vector<16x384xf32> -> vector<16x384xf32>
    %c0_9 = arith.constant 0 : index
    %c0_10 = arith.constant 0 : index
    %18 = vector.load %arg5[%c0_9, %c0_10] : memref<16x128xf32, #tpu.memory_space<vmem>>, vector<16x128xf32>
    %c0_11 = arith.constant 0 : index
    %c0_12 = arith.constant 0 : index
    %19 = vector.load %arg6[%c0_11, %c0_12] : memref<16x128xf32, #tpu.memory_space<vmem>>, vector<16x128xf32>
    %20 = tpu.iota {dimensions = array<i32: 1>} : vector<16x128xi32>
    %c2_i32 = arith.constant 2 : i32
    %c0_i32 = arith.constant 0 : i32
    %21 = arith.cmpi eq, %c2_i32, %c0_i32 : i32
    %c1_i32 = arith.constant 1 : i32
    %22 = arith.select %21, %c1_i32, %c2_i32 : i32
    %23 = vector.broadcast %22 : i32 to vector<16x128xi32>
    %24 = arith.remsi %20, %23 : vector<16x128xi32>
    %c0_i32_13 = arith.constant 0 : i32
    %25 = vector.broadcast %c0_i32_13 : i32 to vector<16x128xi32>
    %26 = arith.cmpi ne, %24, %25 : vector<16x128xi32>
    %c0_i32_14 = arith.constant 0 : i32
    %27 = vector.broadcast %c0_i32_14 : i32 to vector<16x128xi32>
    %28 = arith.cmpi slt, %24, %27 : vector<16x128xi32>
    %c0_i32_15 = arith.constant 0 : i32
    %29 = arith.cmpi slt, %22, %c0_i32_15 : i32
    %30 = vector.broadcast %29 : i1 to vector<16x128xi1>
    %31 = vector.broadcast %30 : vector<16x128xi1> to vector<16x128xi1>
    %32 = arith.xori %28, %31 : vector<16x128xi1>
    %33 = arith.andi %32, %26 : vector<16x128xi1>
    %34 = vector.broadcast %22 : i32 to vector<16x128xi32>
    %35 = arith.addi %24, %34 : vector<16x128xi32>
    %36 = arith.select %33, %35, %24 : vector<16x128xi1>, vector<16x128xi32>
    %c0_i32_16 = arith.constant 0 : i32
    %37 = vector.broadcast %c0_i32_16 : i32 to vector<16x128xi32>
    %38 = arith.cmpi eq, %36, %37 : vector<16x128xi32>
    %39 = vector.extract_strided_slice %17 {offsets = [0, 0], sizes = [16, 128], strides = [1, 1]} : vector<16x384xf32> to vector<16x128xf32>
    %40 = arith.mulf %39, %18 : vector<16x128xf32>
    %41 = vector.extract_strided_slice %39 {offsets = [0, 1], sizes = [16, 127], strides = [1, 1]} : vector<16x128xf32> to vector<16x127xf32>
    %42 = vector.extract_strided_slice %39 {offsets = [0, 0], sizes = [16, 1], strides = [1, 1]} : vector<16x128xf32> to vector<16x1xf32>
    %43 = tpu.concatenate %41, %42 in 1 : vector<16x127xf32>, vector<16x1xf32> -> vector<16x128xf32>
    %44 = vector.extract_strided_slice %39 {offsets = [0, 127], sizes = [16, 1], strides = [1, 1]} : vector<16x128xf32> to vector<16x1xf32>
    %45 = vector.extract_strided_slice %39 {offsets = [0, 0], sizes = [16, 127], strides = [1, 1]} : vector<16x128xf32> to vector<16x127xf32>
    %46 = tpu.concatenate %44, %45 in 1 : vector<16x1xf32>, vector<16x127xf32> -> vector<16x128xf32>
    %47 = arith.select %38, %43, %46 : vector<16x128xi1>, vector<16x128xf32>
    %48 = arith.mulf %47, %19 : vector<16x128xf32>
    %49 = arith.addf %40, %48 : vector<16x128xf32>
    %cst_17 = arith.constant 0.176776692 : f32
    %50 = vector.broadcast %cst_17 : f32 to vector<16x128xf32>
    %51 = arith.mulf %49, %50 : vector<16x128xf32>
    %52 = vector.extract_strided_slice %17 {offsets = [0, 128], sizes = [16, 128], strides = [1, 1]} : vector<16x384xf32> to vector<16x128xf32>
    %53 = arith.mulf %52, %18 : vector<16x128xf32>
    %54 = vector.extract_strided_slice %52 {offsets = [0, 1], sizes = [16, 127], strides = [1, 1]} : vector<16x128xf32> to vector<16x127xf32>
    %55 = vector.extract_strided_slice %52 {offsets = [0, 0], sizes = [16, 1], strides = [1, 1]} : vector<16x128xf32> to vector<16x1xf32>
    %56 = tpu.concatenate %54, %55 in 1 : vector<16x127xf32>, vector<16x1xf32> -> vector<16x128xf32>
    %57 = vector.extract_strided_slice %52 {offsets = [0, 127], sizes = [16, 1], strides = [1, 1]} : vector<16x128xf32> to vector<16x1xf32>
    %58 = vector.extract_strided_slice %52 {offsets = [0, 0], sizes = [16, 127], strides = [1, 1]} : vector<16x128xf32> to vector<16x127xf32>
    %59 = tpu.concatenate %57, %58 in 1 : vector<16x1xf32>, vector<16x127xf32> -> vector<16x128xf32>
    %60 = arith.select %38, %56, %59 : vector<16x128xi1>, vector<16x128xf32>
    %61 = arith.mulf %60, %19 : vector<16x128xf32>
    %62 = arith.addf %53, %61 : vector<16x128xf32>
    %63 = vector.extract_strided_slice %17 {offsets = [0, 256], sizes = [16, 128], strides = [1, 1]} : vector<16x384xf32> to vector<16x128xf32>
    %64 = vector.extract_strided_slice %51 {offsets = [0, 0], sizes = [16, 32], strides = [1, 1]} : vector<16x128xf32> to vector<16x32xf32>
    %65 = arith.truncf %64 : vector<16x32xf32> to vector<16x32xbf16>
    %c0_18 = arith.constant 0 : index
    %c0_19 = arith.constant 0 : index
    %c0_20 = arith.constant 0 : index
    %c0_21 = arith.constant 0 : index
    %66 = vector.load %arg7[%c0_18, %c0_19, %c0_20, %c0_21] : memref<1x4x16x32xbf16, #tpu.memory_space<vmem>>, vector<1x1x16x32xbf16>
    %67 = vector.shape_cast %66 : vector<1x1x16x32xbf16> to vector<16x32xbf16>
    %68 = vector.shape_cast %65 : vector<16x32xbf16> to vector<1x1x16x32xbf16>
    tpu.vector_store %arg7[%c0_18, %c0_19, %c0_20, %c0_21], %68 {strides = array<i32>} : memref<1x4x16x32xbf16, #tpu.memory_space<vmem>>, vector<1x1x16x32xbf16>,
    %69 = vector.extract_strided_slice %62 {offsets = [0, 0], sizes = [16, 32], strides = [1, 1]} : vector<16x128xf32> to vector<16x32xf32>
    %70 = arith.truncf %69 : vector<16x32xf32> to vector<16x32xbf16>
    %c0_22 = arith.constant 0 : index
    %c0_23 = arith.constant 0 : index
    %c0_24 = arith.constant 0 : index
    %c0_25 = arith.constant 0 : index
    %71 = vector.load %arg8[%c0_22, %c0_23, %c0_24, %c0_25] : memref<1x4x16x32xbf16, #tpu.memory_space<vmem>>, vector<1x1x16x32xbf16>
    %72 = vector.shape_cast %71 : vector<1x1x16x32xbf16> to vector<16x32xbf16>
    %73 = vector.shape_cast %70 : vector<16x32xbf16> to vector<1x1x16x32xbf16>
    tpu.vector_store %arg8[%c0_22, %c0_23, %c0_24, %c0_25], %73 {strides = array<i32>} : memref<1x4x16x32xbf16, #tpu.memory_space<vmem>>, vector<1x1x16x32xbf16>,
    %74 = vector.extract_strided_slice %63 {offsets = [0, 0], sizes = [16, 32], strides = [1, 1]} : vector<16x128xf32> to vector<16x32xf32>
    %75 = arith.truncf %74 : vector<16x32xf32> to vector<16x32xbf16>
    %c0_26 = arith.constant 0 : index
    %c0_27 = arith.constant 0 : index
    %c0_28 = arith.constant 0 : index
    %c0_29 = arith.constant 0 : index
    %76 = vector.load %arg9[%c0_26, %c0_27, %c0_28, %c0_29] : memref<1x4x16x32xbf16, #tpu.memory_space<vmem>>, vector<1x1x16x32xbf16>
    %77 = vector.shape_cast %76 : vector<1x1x16x32xbf16> to vector<16x32xbf16>
    %78 = vector.shape_cast %75 : vector<16x32xbf16> to vector<1x1x16x32xbf16>
    tpu.vector_store %arg9[%c0_26, %c0_27, %c0_28, %c0_29], %78 {strides = array<i32>} : memref<1x4x16x32xbf16, #tpu.memory_space<vmem>>, vector<1x1x16x32xbf16>,
    %79 = vector.extract_strided_slice %51 {offsets = [0, 32], sizes = [16, 32], strides = [1, 1]} : vector<16x128xf32> to vector<16x32xf32>
    %80 = arith.truncf %79 : vector<16x32xf32> to vector<16x32xbf16>
    %c0_30 = arith.constant 0 : index
    %c1 = arith.constant 1 : index
    %c0_31 = arith.constant 0 : index
    %c0_32 = arith.constant 0 : index
    %81 = vector.load %arg7[%c0_30, %c1, %c0_31, %c0_32] : memref<1x4x16x32xbf16, #tpu.memory_space<vmem>>, vector<1x1x16x32xbf16>
    %82 = vector.shape_cast %81 : vector<1x1x16x32xbf16> to vector<16x32xbf16>
    %83 = vector.shape_cast %80 : vector<16x32xbf16> to vector<1x1x16x32xbf16>
    tpu.vector_store %arg7[%c0_30, %c1, %c0_31, %c0_32], %83 {strides = array<i32>} : memref<1x4x16x32xbf16, #tpu.memory_space<vmem>>, vector<1x1x16x32xbf16>,
    %84 = vector.extract_strided_slice %62 {offsets = [0, 32], sizes = [16, 32], strides = [1, 1]} : vector<16x128xf32> to vector<16x32xf32>
    %85 = arith.truncf %84 : vector<16x32xf32> to vector<16x32xbf16>
    %c0_33 = arith.constant 0 : index
    %c1_34 = arith.constant 1 : index
    %c0_35 = arith.constant 0 : index
    %c0_36 = arith.constant 0 : index
    %86 = vector.load %arg8[%c0_33, %c1_34, %c0_35, %c0_36] : memref<1x4x16x32xbf16, #tpu.memory_space<vmem>>, vector<1x1x16x32xbf16>
    %87 = vector.shape_cast %86 : vector<1x1x16x32xbf16> to vector<16x32xbf16>
    %88 = vector.shape_cast %85 : vector<16x32xbf16> to vector<1x1x16x32xbf16>
    tpu.vector_store %arg8[%c0_33, %c1_34, %c0_35, %c0_36], %88 {strides = array<i32>} : memref<1x4x16x32xbf16, #tpu.memory_space<vmem>>, vector<1x1x16x32xbf16>,
    %89 = vector.extract_strided_slice %63 {offsets = [0, 32], sizes = [16, 32], strides = [1, 1]} : vector<16x128xf32> to vector<16x32xf32>
    %90 = arith.truncf %89 : vector<16x32xf32> to vector<16x32xbf16>
    %c0_37 = arith.constant 0 : index
    %c1_38 = arith.constant 1 : index
    %c0_39 = arith.constant 0 : index
    %c0_40 = arith.constant 0 : index
    %91 = vector.load %arg9[%c0_37, %c1_38, %c0_39, %c0_40] : memref<1x4x16x32xbf16, #tpu.memory_space<vmem>>, vector<1x1x16x32xbf16>
    %92 = vector.shape_cast %91 : vector<1x1x16x32xbf16> to vector<16x32xbf16>
    %93 = vector.shape_cast %90 : vector<16x32xbf16> to vector<1x1x16x32xbf16>
    tpu.vector_store %arg9[%c0_37, %c1_38, %c0_39, %c0_40], %93 {strides = array<i32>} : memref<1x4x16x32xbf16, #tpu.memory_space<vmem>>, vector<1x1x16x32xbf16>,
    %94 = vector.extract_strided_slice %51 {offsets = [0, 64], sizes = [16, 32], strides = [1, 1]} : vector<16x128xf32> to vector<16x32xf32>
    %95 = arith.truncf %94 : vector<16x32xf32> to vector<16x32xbf16>
    %c0_41 = arith.constant 0 : index
    %c2 = arith.constant 2 : index
    %c0_42 = arith.constant 0 : index
    %c0_43 = arith.constant 0 : index
    %96 = vector.load %arg7[%c0_41, %c2, %c0_42, %c0_43] : memref<1x4x16x32xbf16, #tpu.memory_space<vmem>>, vector<1x1x16x32xbf16>
    %97 = vector.shape_cast %96 : vector<1x1x16x32xbf16> to vector<16x32xbf16>
    %98 = vector.shape_cast %95 : vector<16x32xbf16> to vector<1x1x16x32xbf16>
    tpu.vector_store %arg7[%c0_41, %c2, %c0_42, %c0_43], %98 {strides = array<i32>} : memref<1x4x16x32xbf16, #tpu.memory_space<vmem>>, vector<1x1x16x32xbf16>,
    %99 = vector.extract_strided_slice %62 {offsets = [0, 64], sizes = [16, 32], strides = [1, 1]} : vector<16x128xf32> to vector<16x32xf32>
    %100 = arith.truncf %99 : vector<16x32xf32> to vector<16x32xbf16>
    %c0_44 = arith.constant 0 : index
    %c2_45 = arith.constant 2 : index
    %c0_46 = arith.constant 0 : index
    %c0_47 = arith.constant 0 : index
    %101 = vector.load %arg8[%c0_44, %c2_45, %c0_46, %c0_47] : memref<1x4x16x32xbf16, #tpu.memory_space<vmem>>, vector<1x1x16x32xbf16>
    %102 = vector.shape_cast %101 : vector<1x1x16x32xbf16> to vector<16x32xbf16>
    %103 = vector.shape_cast %100 : vector<16x32xbf16> to vector<1x1x16x32xbf16>
    tpu.vector_store %arg8[%c0_44, %c2_45, %c0_46, %c0_47], %103 {strides = array<i32>} : memref<1x4x16x32xbf16, #tpu.memory_space<vmem>>, vector<1x1x16x32xbf16>,
    %104 = vector.extract_strided_slice %63 {offsets = [0, 64], sizes = [16, 32], strides = [1, 1]} : vector<16x128xf32> to vector<16x32xf32>
    %105 = arith.truncf %104 : vector<16x32xf32> to vector<16x32xbf16>
    %c0_48 = arith.constant 0 : index
    %c2_49 = arith.constant 2 : index
    %c0_50 = arith.constant 0 : index
    %c0_51 = arith.constant 0 : index
    %106 = vector.load %arg9[%c0_48, %c2_49, %c0_50, %c0_51] : memref<1x4x16x32xbf16, #tpu.memory_space<vmem>>, vector<1x1x16x32xbf16>
    %107 = vector.shape_cast %106 : vector<1x1x16x32xbf16> to vector<16x32xbf16>
    %108 = vector.shape_cast %105 : vector<16x32xbf16> to vector<1x1x16x32xbf16>
    tpu.vector_store %arg9[%c0_48, %c2_49, %c0_50, %c0_51], %108 {strides = array<i32>} : memref<1x4x16x32xbf16, #tpu.memory_space<vmem>>, vector<1x1x16x32xbf16>,
    %109 = vector.extract_strided_slice %51 {offsets = [0, 96], sizes = [16, 32], strides = [1, 1]} : vector<16x128xf32> to vector<16x32xf32>
    %110 = arith.truncf %109 : vector<16x32xf32> to vector<16x32xbf16>
    %c0_52 = arith.constant 0 : index
    %c3 = arith.constant 3 : index
    %c0_53 = arith.constant 0 : index
    %c0_54 = arith.constant 0 : index
    %111 = vector.load %arg7[%c0_52, %c3, %c0_53, %c0_54] : memref<1x4x16x32xbf16, #tpu.memory_space<vmem>>, vector<1x1x16x32xbf16>
    %112 = vector.shape_cast %111 : vector<1x1x16x32xbf16> to vector<16x32xbf16>
    %113 = vector.shape_cast %110 : vector<16x32xbf16> to vector<1x1x16x32xbf16>
    tpu.vector_store %arg7[%c0_52, %c3, %c0_53, %c0_54], %113 {strides = array<i32>} : memref<1x4x16x32xbf16, #tpu.memory_space<vmem>>, vector<1x1x16x32xbf16>,
    %114 = vector.extract_strided_slice %62 {offsets = [0, 96], sizes = [16, 32], strides = [1, 1]} : vector<16x128xf32> to vector<16x32xf32>
    %115 = arith.truncf %114 : vector<16x32xf32> to vector<16x32xbf16>
    %c0_55 = arith.constant 0 : index
    %c3_56 = arith.constant 3 : index
    %c0_57 = arith.constant 0 : index
    %c0_58 = arith.constant 0 : index
    %116 = vector.load %arg8[%c0_55, %c3_56, %c0_57, %c0_58] : memref<1x4x16x32xbf16, #tpu.memory_space<vmem>>, vector<1x1x16x32xbf16>
    %117 = vector.shape_cast %116 : vector<1x1x16x32xbf16> to vector<16x32xbf16>
    %118 = vector.shape_cast %115 : vector<16x32xbf16> to vector<1x1x16x32xbf16>
    tpu.vector_store %arg8[%c0_55, %c3_56, %c0_57, %c0_58], %118 {strides = array<i32>} : memref<1x4x16x32xbf16, #tpu.memory_space<vmem>>, vector<1x1x16x32xbf16>,
    %119 = vector.extract_strided_slice %63 {offsets = [0, 96], sizes = [16, 32], strides = [1, 1]} : vector<16x128xf32> to vector<16x32xf32>
    %120 = arith.truncf %119 : vector<16x32xf32> to vector<16x32xbf16>
    %c0_59 = arith.constant 0 : index
    %c3_60 = arith.constant 3 : index
    %c0_61 = arith.constant 0 : index
    %c0_62 = arith.constant 0 : index
    %121 = vector.load %arg9[%c0_59, %c3_60, %c0_61, %c0_62] : memref<1x4x16x32xbf16, #tpu.memory_space<vmem>>, vector<1x1x16x32xbf16>
    %122 = vector.shape_cast %121 : vector<1x1x16x32xbf16> to vector<16x32xbf16>
    %123 = vector.shape_cast %120 : vector<16x32xbf16> to vector<1x1x16x32xbf16>
    tpu.vector_store %arg9[%c0_59, %c3_60, %c0_61, %c0_62], %123 {strides = array<i32>} : memref<1x4x16x32xbf16, #tpu.memory_space<vmem>>, vector<1x1x16x32xbf16>,
    return
  }
  func.func @transform_0(%arg0: i32, %arg1: i32) -> (i32, i32, i32) {
    %c0_i32 = arith.constant 0 : i32
    %c0_i32_0 = arith.constant 0 : i32
    return %arg0, %arg1, %c0_i32 : i32, i32, i32
  }
  func.func @transform_1(%arg0: i32, %arg1: i32) -> (i32, i32) {
    %c0_i32 = arith.constant 0 : i32
    %c0_i32_0 = arith.constant 0 : i32
    %c0_i32_1 = arith.constant 0 : i32
    return %c0_i32, %c0_i32_0 : i32, i32
  }
  func.func @transform_2(%arg0: i32, %arg1: i32) -> (i32, i32) {
    %c0_i32 = arith.constant 0 : i32
    %c0_i32_0 = arith.constant 0 : i32
    %c0_i32_1 = arith.constant 0 : i32
    return %c0_i32, %c0_i32_0 : i32, i32
  }
  func.func @transform_3(%arg0: i32, %arg1: i32) -> (i32, i32) {
    %c0_i32 = arith.constant 0 : i32
    %c0_i32_0 = arith.constant 0 : i32
    return %arg1, %c0_i32 : i32, i32
  }
  func.func @transform_4(%arg0: i32, %arg1: i32) -> (i32, i32) {
    %c0_i32 = arith.constant 0 : i32
    %c0_i32_0 = arith.constant 0 : i32
    return %arg1, %c0_i32 : i32, i32
  }
  func.func @transform_5(%arg0: i32, %arg1: i32) -> (i32, i32, i32, i32) {
    %c0_i32 = arith.constant 0 : i32
    %c0_i32_0 = arith.constant 0 : i32
    %c0_i32_1 = arith.constant 0 : i32
    return %arg0, %c0_i32, %arg1, %c0_i32_0 : i32, i32, i32, i32
  }
  func.func @transform_6(%arg0: i32, %arg1: i32) -> (i32, i32, i32, i32) {
    %c0_i32 = arith.constant 0 : i32
    %c0_i32_0 = arith.constant 0 : i32
    %c0_i32_1 = arith.constant 0 : i32
    return %arg0, %c0_i32, %arg1, %c0_i32_0 : i32, i32, i32, i32
  }
  func.func @transform_7(%arg0: i32, %arg1: i32) -> (i32, i32, i32, i32) {
    %c0_i32 = arith.constant 0 : i32
    %c0_i32_0 = arith.constant 0 : i32
    %c0_i32_1 = arith.constant 0 : i32
    return %arg0, %c0_i32, %arg1, %c0_i32_0 : i32, i32, i32, i32
  }
}

module attributes {stable_mosaic.version = 11 : i64} {
  func.func @qkv_rope_kernel(%arg0: i32, %arg1: i32, %arg2: memref<1x16x128xf32, #tpu.memory_space<vmem>>, %arg3: memref<128x384xbf16, #tpu.memory_space<vmem>>, %arg4: memref<1x128xf32, #tpu.memory_space<vmem>>, %arg5: memref<16x128xf32, #tpu.memory_space<vmem>>, %arg6: memref<16x128xf32, #tpu.memory_space<vmem>>, %arg7: memref<1x4x16x32xbf16, #tpu.memory_space<vmem>>, %arg8: memref<1x4x16x32xbf16, #tpu.memory_space<vmem>>, %arg9: memref<1x4x16x32xbf16, #tpu.memory_space<vmem>>) attributes {dimension_semantics = [#tpu.dimension_semantics<parallel>, #tpu.dimension_semantics<parallel>], iteration_bounds = array<i64: 2, 2>, scalar_prefetch = 0 : i64, scratch_operands = 0 : i64, tpu.core_type = #tpu.core_type<tc>, window_params = [{transform_indices = @transform_0, window_bounds = array<i64: 1, 16, 128>}, {pipeline_mode = #tpu.pipeline_mode<synchronous>, transform_indices = @transform_1, window_bounds = array<i64: 128, 384>}, {pipeline_mode = #tpu.pipeline_mode<synchronous>, transform_indices = @transform_2, window_bounds = array<i64: 1, 128>}, {transform_indices = @transform_3, window_bounds = array<i64: 16, 128>}, {transform_indices = @transform_4, window_bounds = array<i64: 16, 128>}, {transform_indices = @transform_5, window_bounds = array<i64: 1, 4, 16, 32>}, {transform_indices = @transform_6, window_bounds = array<i64: 1, 4, 16, 32>}, {transform_indices = @transform_7, window_bounds = array<i64: 1, 4, 16, 32>}]} {
    %c0 = arith.constant 0 : index
    %c0_0 = arith.constant 0 : index
    %c0_1 = arith.constant 0 : index
    %0 = vector.load %arg2[%c0, %c0_0, %c0_1] : memref<1x16x128xf32, #tpu.memory_space<vmem>>, vector<1x16x128xf32>
    %1 = vector.shape_cast %0 : vector<1x16x128xf32> to vector<16x128xf32>
    %2 = arith.mulf %1, %1 : vector<16x128xf32>
    %cst = arith.constant dense<0.000000e+00> : vector<16xf32>
    %3 = vector.multi_reduction <add>, %2, %cst [1] : vector<16x128xf32> to vector<16xf32>
    %4 = vector.shape_cast %3 : vector<16xf32> to vector<16x1xf32>
    %cst_2 = arith.constant 1.280000e+02 : f32
    %5 = vector.broadcast %cst_2 : f32 to vector<16x1xf32>
    %6 = arith.divf %4, %5 : vector<16x1xf32>
    %cst_3 = arith.constant 9.99999974E-6 : f32
    %7 = vector.broadcast %cst_3 : f32 to vector<16x1xf32>
    %8 = arith.addf %6, %7 : vector<16x1xf32>
    %9 = math.rsqrt %8 : vector<16x1xf32>
    %10 = vector.broadcast %9 : vector<16x1xf32> to vector<16x128xf32>
    %11 = arith.mulf %1, %10 : vector<16x128xf32>
    %c0_4 = arith.constant 0 : index
    %c0_5 = arith.constant 0 : index
    %12 = vector.load %arg4[%c0_4, %c0_5] : memref<1x128xf32, #tpu.memory_space<vmem>>, vector<1x128xf32>
    %13 = vector.broadcast %12 : vector<1x128xf32> to vector<16x128xf32>
    %14 = arith.mulf %11, %13 : vector<16x128xf32>
    %15 = arith.truncf %14 : vector<16x128xf32> to vector<16x128xbf16>
    %c0_6 = arith.constant 0 : index
    %c0_7 = arith.constant 0 : index
    %16 = vector.load %arg3[%c0_6, %c0_7] : memref<128x384xbf16, #tpu.memory_space<vmem>>, vector<128x384xbf16>
    %cst_8 = arith.constant dense<0.000000e+00> : vector<16x384xf32>
    %17 = tpu.matmul %15, %16, %cst_8 {dimension_numbers = #tpu.dot_dimension_numbers<[1], [0], [0], [1], [0, 0, 1, 1], [], []>} : vector<16x128xbf16>, vector<128x384xbf16>, vector<16x384xf32> -> vector<16x384xf32>
    %c0_9 = arith.constant 0 : index
    %c0_10 = arith.constant 0 : index
    %18 = vector.load %arg5[%c0_9, %c0_10] : memref<16x128xf32, #tpu.memory_space<vmem>>, vector<16x128xf32>
    %c0_11 = arith.constant 0 : index
    %c0_12 = arith.constant 0 : index
    %19 = vector.load %arg6[%c0_11, %c0_12] : memref<16x128xf32, #tpu.memory_space<vmem>>, vector<16x128xf32>
    %20 = tpu.iota {dimensions = array<i32: 1>} : vector<16x128xi32>
    %c2_i32 = arith.constant 2 : i32
    %c0_i32 = arith.constant 0 : i32
    %21 = arith.cmpi eq, %c2_i32, %c0_i32 : i32
    %c1_i32 = arith.constant 1 : i32
    %22 = arith.select %21, %c1_i32, %c2_i32 : i32
    %23 = vector.broadcast %22 : i32 to vector<16x128xi32>
    %24 = arith.remsi %20, %23 : vector<16x128xi32>
    %c0_i32_13 = arith.constant 0 : i32
    %25 = vector.broadcast %c0_i32_13 : i32 to vector<16x128xi32>
    %26 = arith.cmpi ne, %24, %25 : vector<16x128xi32>
    %c0_i32_14 = arith.constant 0 : i32
    %27 = vector.broadcast %c0_i32_14 : i32 to vector<16x128xi32>
    %28 = arith.cmpi slt, %24, %27 : vector<16x128xi32>
    %c0_i32_15 = arith.constant 0 : i32
    %29 = arith.cmpi slt, %22, %c0_i32_15 : i32
    %30 = vector.broadcast %29 : i1 to vector<16x128xi1>
    %31 = vector.broadcast %30 : vector<16x128xi1> to vector<16x128xi1>
    %32 = arith.xori %28, %31 : vector<16x128xi1>
    %33 = arith.andi %32, %26 : vector<16x128xi1>
    %34 = vector.broadcast %22 : i32 to vector<16x128xi32>
    %35 = arith.addi %24, %34 : vector<16x128xi32>
    %36 = arith.select %33, %35, %24 : vector<16x128xi1>, vector<16x128xi32>
    %c0_i32_16 = arith.constant 0 : i32
    %37 = vector.broadcast %c0_i32_16 : i32 to vector<16x128xi32>
    %38 = arith.cmpi eq, %36, %37 : vector<16x128xi32>
    %39 = vector.extract_strided_slice %17 {offsets = [0, 0], sizes = [16, 128], strides = [1, 1]} : vector<16x384xf32> to vector<16x128xf32>
    %40 = arith.mulf %39, %18 : vector<16x128xf32>
    %41 = vector.extract_strided_slice %39 {offsets = [0, 1], sizes = [16, 127], strides = [1, 1]} : vector<16x128xf32> to vector<16x127xf32>
    %42 = vector.extract_strided_slice %39 {offsets = [0, 0], sizes = [16, 1], strides = [1, 1]} : vector<16x128xf32> to vector<16x1xf32>
    %43 = tpu.concatenate %41, %42 in 1 : vector<16x127xf32>, vector<16x1xf32> -> vector<16x128xf32>
    %44 = vector.extract_strided_slice %39 {offsets = [0, 127], sizes = [16, 1], strides = [1, 1]} : vector<16x128xf32> to vector<16x1xf32>
    %45 = vector.extract_strided_slice %39 {offsets = [0, 0], sizes = [16, 127], strides = [1, 1]} : vector<16x128xf32> to vector<16x127xf32>
    %46 = tpu.concatenate %44, %45 in 1 : vector<16x1xf32>, vector<16x127xf32> -> vector<16x128xf32>
    %47 = arith.select %38, %43, %46 : vector<16x128xi1>, vector<16x128xf32>
    %48 = arith.mulf %47, %19 : vector<16x128xf32>
    %49 = arith.addf %40, %48 : vector<16x128xf32>
    %cst_17 = arith.constant 0.176776692 : f32
    %50 = vector.broadcast %cst_17 : f32 to vector<16x128xf32>
    %51 = arith.mulf %49, %50 : vector<16x128xf32>
    %52 = vector.extract_strided_slice %17 {offsets = [0, 128], sizes = [16, 128], strides = [1, 1]} : vector<16x384xf32> to vector<16x128xf32>
    %53 = arith.mulf %52, %18 : vector<16x128xf32>
    %54 = vector.extract_strided_slice %52 {offsets = [0, 1], sizes = [16, 127], strides = [1, 1]} : vector<16x128xf32> to vector<16x127xf32>
    %55 = vector.extract_strided_slice %52 {offsets = [0, 0], sizes = [16, 1], strides = [1, 1]} : vector<16x128xf32> to vector<16x1xf32>
    %56 = tpu.concatenate %54, %55 in 1 : vector<16x127xf32>, vector<16x1xf32> -> vector<16x128xf32>
    %57 = vector.extract_strided_slice %52 {offsets = [0, 127], sizes = [16, 1], strides = [1, 1]} : vector<16x128xf32> to vector<16x1xf32>
    %58 = vector.extract_strided_slice %52 {offsets = [0, 0], sizes = [16, 127], strides = [1, 1]} : vector<16x128xf32> to vector<16x127xf32>
    %59 = tpu.concatenate %57, %58 in 1 : vector<16x1xf32>, vector<16x127xf32> -> vector<16x128xf32>
    %60 = arith.select %38, %56, %59 : vector<16x128xi1>, vector<16x128xf32>
    %61 = arith.mulf %60, %19 : vector<16x128xf32>
    %62 = arith.addf %53, %61 : vector<16x128xf32>
    %63 = vector.extract_strided_slice %17 {offsets = [0, 256], sizes = [16, 128], strides = [1, 1]} : vector<16x384xf32> to vector<16x128xf32>
    %64 = vector.extract_strided_slice %51 {offsets = [0, 0], sizes = [16, 32], strides = [1, 1]} : vector<16x128xf32> to vector<16x32xf32>
    %65 = arith.truncf %64 : vector<16x32xf32> to vector<16x32xbf16>
    %c0_18 = arith.constant 0 : index
    %c0_19 = arith.constant 0 : index
    %c0_20 = arith.constant 0 : index
    %c0_21 = arith.constant 0 : index
    %66 = vector.load %arg7[%c0_18, %c0_19, %c0_20, %c0_21] : memref<1x4x16x32xbf16, #tpu.memory_space<vmem>>, vector<1x1x16x32xbf16>
    %67 = vector.shape_cast %66 : vector<1x1x16x32xbf16> to vector<16x32xbf16>
    %68 = vector.shape_cast %65 : vector<16x32xbf16> to vector<1x1x16x32xbf16>
    tpu.vector_store %arg7[%c0_18, %c0_19, %c0_20, %c0_21], %68 {strides = array<i32>} : memref<1x4x16x32xbf16, #tpu.memory_space<vmem>>, vector<1x1x16x32xbf16>,
    %69 = vector.extract_strided_slice %62 {offsets = [0, 0], sizes = [16, 32], strides = [1, 1]} : vector<16x128xf32> to vector<16x32xf32>
    %70 = arith.truncf %69 : vector<16x32xf32> to vector<16x32xbf16>
    %c0_22 = arith.constant 0 : index
    %c0_23 = arith.constant 0 : index
    %c0_24 = arith.constant 0 : index
    %c0_25 = arith.constant 0 : index
    %71 = vector.load %arg8[%c0_22, %c0_23, %c0_24, %c0_25] : memref<1x4x16x32xbf16, #tpu.memory_space<vmem>>, vector<1x1x16x32xbf16>
    %72 = vector.shape_cast %71 : vector<1x1x16x32xbf16> to vector<16x32xbf16>
    %73 = vector.shape_cast %70 : vector<16x32xbf16> to vector<1x1x16x32xbf16>
    tpu.vector_store %arg8[%c0_22, %c0_23, %c0_24, %c0_25], %73 {strides = array<i32>} : memref<1x4x16x32xbf16, #tpu.memory_space<vmem>>, vector<1x1x16x32xbf16>,
    %74 = vector.extract_strided_slice %63 {offsets = [0, 0], sizes = [16, 32], strides = [1, 1]} : vector<16x128xf32> to vector<16x32xf32>
    %75 = arith.truncf %74 : vector<16x32xf32> to vector<16x32xbf16>
    %c0_26 = arith.constant 0 : index
    %c0_27 = arith.constant 0 : index
    %c0_28 = arith.constant 0 : index
    %c0_29 = arith.constant 0 : index
    %76 = vector.load %arg9[%c0_26, %c0_27, %c0_28, %c0_29] : memref<1x4x16x32xbf16, #tpu.memory_space<vmem>>, vector<1x1x16x32xbf16>
    %77 = vector.shape_cast %76 : vector<1x1x16x32xbf16> to vector<16x32xbf16>
    %78 = vector.shape_cast %75 : vector<16x32xbf16> to vector<1x1x16x32xbf16>
    tpu.vector_store %arg9[%c0_26, %c0_27, %c0_28, %c0_29], %78 {strides = array<i32>} : memref<1x4x16x32xbf16, #tpu.memory_space<vmem>>, vector<1x1x16x32xbf16>,
    %79 = vector.extract_strided_slice %51 {offsets = [0, 32], sizes = [16, 32], strides = [1, 1]} : vector<16x128xf32> to vector<16x32xf32>
    %80 = arith.truncf %79 : vector<16x32xf32> to vector<16x32xbf16>
    %c0_30 = arith.constant 0 : index
    %c1 = arith.constant 1 : index
    %c0_31 = arith.constant 0 : index
    %c0_32 = arith.constant 0 : index
    %81 = vector.load %arg7[%c0_30, %c1, %c0_31, %c0_32] : memref<1x4x16x32xbf16, #tpu.memory_space<vmem>>, vector<1x1x16x32xbf16>
    %82 = vector.shape_cast %81 : vector<1x1x16x32xbf16> to vector<16x32xbf16>
    %83 = vector.shape_cast %80 : vector<16x32xbf16> to vector<1x1x16x32xbf16>
    tpu.vector_store %arg7[%c0_30, %c1, %c0_31, %c0_32], %83 {strides = array<i32>} : memref<1x4x16x32xbf16, #tpu.memory_space<vmem>>, vector<1x1x16x32xbf16>,
    %84 = vector.extract_strided_slice %62 {offsets = [0, 32], sizes = [16, 32], strides = [1, 1]} : vector<16x128xf32> to vector<16x32xf32>
    %85 = arith.truncf %84 : vector<16x32xf32> to vector<16x32xbf16>
    %c0_33 = arith.constant 0 : index
    %c1_34 = arith.constant 1 : index
    %c0_35 = arith.constant 0 : index
    %c0_36 = arith.constant 0 : index
    %86 = vector.load %arg8[%c0_33, %c1_34, %c0_35, %c0_36] : memref<1x4x16x32xbf16, #tpu.memory_space<vmem>>, vector<1x1x16x32xbf16>
    %87 = vector.shape_cast %86 : vector<1x1x16x32xbf16> to vector<16x32xbf16>
    %88 = vector.shape_cast %85 : vector<16x32xbf16> to vector<1x1x16x32xbf16>
    tpu.vector_store %arg8[%c0_33, %c1_34, %c0_35, %c0_36], %88 {strides = array<i32>} : memref<1x4x16x32xbf16, #tpu.memory_space<vmem>>, vector<1x1x16x32xbf16>,
    %89 = vector.extract_strided_slice %63 {offsets = [0, 32], sizes = [16, 32], strides = [1, 1]} : vector<16x128xf32> to vector<16x32xf32>
    %90 = arith.truncf %89 : vector<16x32xf32> to vector<16x32xbf16>
    %c0_37 = arith.constant 0 : index
    %c1_38 = arith.constant 1 : index
    %c0_39 = arith.constant 0 : index
    %c0_40 = arith.constant 0 : index
    %91 = vector.load %arg9[%c0_37, %c1_38, %c0_39, %c0_40] : memref<1x4x16x32xbf16, #tpu.memory_space<vmem>>, vector<1x1x16x32xbf16>
    %92 = vector.shape_cast %91 : vector<1x1x16x32xbf16> to vector<16x32xbf16>
    %93 = vector.shape_cast %90 : vector<16x32xbf16> to vector<1x1x16x32xbf16>
    tpu.vector_store %arg9[%c0_37, %c1_38, %c0_39, %c0_40], %93 {strides = array<i32>} : memref<1x4x16x32xbf16, #tpu.memory_space<vmem>>, vector<1x1x16x32xbf16>,
    %94 = vector.extract_strided_slice %51 {offsets = [0, 64], sizes = [16, 32], strides = [1, 1]} : vector<16x128xf32> to vector<16x32xf32>
    %95 = arith.truncf %94 : vector<16x32xf32> to vector<16x32xbf16>
    %c0_41 = arith.constant 0 : index
    %c2 = arith.constant 2 : index
    %c0_42 = arith.constant 0 : index
    %c0_43 = arith.constant 0 : index
    %96 = vector.load %arg7[%c0_41, %c2, %c0_42, %c0_43] : memref<1x4x16x32xbf16, #tpu.memory_space<vmem>>, vector<1x1x16x32xbf16>
    %97 = vector.shape_cast %96 : vector<1x1x16x32xbf16> to vector<16x32xbf16>
    %98 = vector.shape_cast %95 : vector<16x32xbf16> to vector<1x1x16x32xbf16>
    tpu.vector_store %arg7[%c0_41, %c2, %c0_42, %c0_43], %98 {strides = array<i32>} : memref<1x4x16x32xbf16, #tpu.memory_space<vmem>>, vector<1x1x16x32xbf16>,
    %99 = vector.extract_strided_slice %62 {offsets = [0, 64], sizes = [16, 32], strides = [1, 1]} : vector<16x128xf32> to vector<16x32xf32>
    %100 = arith.truncf %99 : vector<16x32xf32> to vector<16x32xbf16>
    %c0_44 = arith.constant 0 : index
    %c2_45 = arith.constant 2 : index
    %c0_46 = arith.constant 0 : index
    %c0_47 = arith.constant 0 : index
    %101 = vector.load %arg8[%c0_44, %c2_45, %c0_46, %c0_47] : memref<1x4x16x32xbf16, #tpu.memory_space<vmem>>, vector<1x1x16x32xbf16>
    %102 = vector.shape_cast %101 : vector<1x1x16x32xbf16> to vector<16x32xbf16>
    %103 = vector.shape_cast %100 : vector<16x32xbf16> to vector<1x1x16x32xbf16>
    tpu.vector_store %arg8[%c0_44, %c2_45, %c0_46, %c0_47], %103 {strides = array<i32>} : memref<1x4x16x32xbf16, #tpu.memory_space<vmem>>, vector<1x1x16x32xbf16>,
    %104 = vector.extract_strided_slice %63 {offsets = [0, 64], sizes = [16, 32], strides = [1, 1]} : vector<16x128xf32> to vector<16x32xf32>
    %105 = arith.truncf %104 : vector<16x32xf32> to vector<16x32xbf16>
    %c0_48 = arith.constant 0 : index
    %c2_49 = arith.constant 2 : index
    %c0_50 = arith.constant 0 : index
    %c0_51 = arith.constant 0 : index
    %106 = vector.load %arg9[%c0_48, %c2_49, %c0_50, %c0_51] : memref<1x4x16x32xbf16, #tpu.memory_space<vmem>>, vector<1x1x16x32xbf16>
    %107 = vector.shape_cast %106 : vector<1x1x16x32xbf16> to vector<16x32xbf16>
    %108 = vector.shape_cast %105 : vector<16x32xbf16> to vector<1x1x16x32xbf16>
    tpu.vector_store %arg9[%c0_48, %c2_49, %c0_50, %c0_51], %108 {strides = array<i32>} : memref<1x4x16x32xbf16, #tpu.memory_space<vmem>>, vector<1x1x16x32xbf16>,
    %109 = vector.extract_strided_slice %51 {offsets = [0, 96], sizes = [16, 32], strides = [1, 1]} : vector<16x128xf32> to vector<16x32xf32>
    %110 = arith.truncf %109 : vector<16x32xf32> to vector<16x32xbf16>
    %c0_52 = arith.constant 0 : index
    %c3 = arith.constant 3 : index
    %c0_53 = arith.constant 0 : index
    %c0_54 = arith.constant 0 : index
    %111 = vector.load %arg7[%c0_52, %c3, %c0_53, %c0_54] : memref<1x4x16x32xbf16, #tpu.memory_space<vmem>>, vector<1x1x16x32xbf16>
    %112 = vector.shape_cast %111 : vector<1x1x16x32xbf16> to vector<16x32xbf16>
    %113 = vector.shape_cast %110 : vector<16x32xbf16> to vector<1x1x16x32xbf16>
    tpu.vector_store %arg7[%c0_52, %c3, %c0_53, %c0_54], %113 {strides = array<i32>} : memref<1x4x16x32xbf16, #tpu.memory_space<vmem>>, vector<1x1x16x32xbf16>,
    %114 = vector.extract_strided_slice %62 {offsets = [0, 96], sizes = [16, 32], strides = [1, 1]} : vector<16x128xf32> to vector<16x32xf32>
    %115 = arith.truncf %114 : vector<16x32xf32> to vector<16x32xbf16>
    %c0_55 = arith.constant 0 : index
    %c3_56 = arith.constant 3 : index
    %c0_57 = arith.constant 0 : index
    %c0_58 = arith.constant 0 : index
    %116 = vector.load %arg8[%c0_55, %c3_56, %c0_57, %c0_58] : memref<1x4x16x32xbf16, #tpu.memory_space<vmem>>, vector<1x1x16x32xbf16>
    %117 = vector.shape_cast %116 : vector<1x1x16x32xbf16> to vector<16x32xbf16>
    %118 = vector.shape_cast %115 : vector<16x32xbf16> to vector<1x1x16x32xbf16>
    tpu.vector_store %arg8[%c0_55, %c3_56, %c0_57, %c0_58], %118 {strides = array<i32>} : memref<1x4x16x32xbf16, #tpu.memory_space<vmem>>, vector<1x1x16x32xbf16>,
    %119 = vector.extract_strided_slice %63 {offsets = [0, 96], sizes = [16, 32], strides = [1, 1]} : vector<16x128xf32> to vector<16x32xf32>
    %120 = arith.truncf %119 : vector<16x32xf32> to vector<16x32xbf16>
    %c0_59 = arith.constant 0 : index
    %c3_60 = arith.constant 3 : index
    %c0_61 = arith.constant 0 : index
    %c0_62 = arith.constant 0 : index
    %121 = vector.load %arg9[%c0_59, %c3_60, %c0_61, %c0_62] : memref<1x4x16x32xbf16, #tpu.memory_space<vmem>>, vector<1x1x16x32xbf16>
    %122 = vector.shape_cast %121 : vector<1x1x16x32xbf16> to vector<16x32xbf16>
    %123 = vector.shape_cast %120 : vector<16x32xbf16> to vector<1x1x16x32xbf16>
    tpu.vector_store %arg9[%c0_59, %c3_60, %c0_61, %c0_62], %123 {strides = array<i32>} : memref<1x4x16x32xbf16, #tpu.memory_space<vmem>>, vector<1x1x16x32xbf16>,
    return
  }
  func.func @transform_0(%arg0: i32, %arg1: i32) -> (i32, i32, i32) {
    %c0_i32 = arith.constant 0 : i32
    %c0_i32_0 = arith.constant 0 : i32
    return %arg0, %arg1, %c0_i32 : i32, i32, i32
  }
  func.func @transform_1(%arg0: i32, %arg1: i32) -> (i32, i32) {
    %c0_i32 = arith.constant 0 : i32
    %c0_i32_0 = arith.constant 0 : i32
    %c0_i32_1 = arith.constant 0 : i32
    return %c0_i32, %c0_i32_0 : i32, i32
  }
  func.func @transform_2(%arg0: i32, %arg1: i32) -> (i32, i32) {
    %c0_i32 = arith.constant 0 : i32
    %c0_i32_0 = arith.constant 0 : i32
    %c0_i32_1 = arith.constant 0 : i32
    return %c0_i32, %c0_i32_0 : i32, i32
  }
  func.func @transform_3(%arg0: i32, %arg1: i32) -> (i32, i32) {
    %c0_i32 = arith.constant 0 : i32
    %c0_i32_0 = arith.constant 0 : i32
    return %arg1, %c0_i32 : i32, i32
  }
  func.func @transform_4(%arg0: i32, %arg1: i32) -> (i32, i32) {
    %c0_i32 = arith.constant 0 : i32
    %c0_i32_0 = arith.constant 0 : i32
    return %arg1, %c0_i32 : i32, i32
  }
  func.func @transform_5(%arg0: i32, %arg1: i32) -> (i32, i32, i32, i32) {
    %c0_i32 = arith.constant 0 : i32
    %c0_i32_0 = arith.constant 0 : i32
    %c0_i32_1 = arith.constant 0 : i32
    return %arg0, %c0_i32, %arg1, %c0_i32_0 : i32, i32, i32, i32
  }
  func.func @transform_6(%arg0: i32, %arg1: i32) -> (i32, i32, i32, i32) {
    %c0_i32 = arith.constant 0 : i32
    %c0_i32_0 = arith.constant 0 : i32
    %c0_i32_1 = arith.constant 0 : i32
    return %arg0, %c0_i32, %arg1, %c0_i32_0 : i32, i32, i32, i32
  }
  func.func @transform_7(%arg0: i32, %arg1: i32) -> (i32, i32, i32, i32) {
    %c0_i32 = arith.constant 0 : i32
    %c0_i32_0 = arith.constant 0 : i32
    %c0_i32_1 = arith.constant 0 : i32
    return %arg0, %c0_i32, %arg1, %c0_i32_0 : i32, i32, i32, i32
  }
}

</mosaic_0001>

<llo_original>
// kernel: tpu_custom_call.1
$region0: #{tpu_custom_call.1}
  #allocation0 [shape = 'u32[]', space=smem, size = 0x4, offset = 0x4, fixed_abs, tag = 'smem constant byte address 0x4 - core index']
  #allocation1 [shape = 'u32[144,128]{1,0:T(1,128)}', space=vmem, size = 0x12000, scoped, tag = 'internal scratch']
  %s0 = inlined_call_operand.hbm [shape: s32[8,128], index: 0, kind: input, shape index: {}]
  %s1 = inlined_call_operand.hbm [shape: s32[8,128], index: 1, kind: output, shape index: {}]
  %s2 = sld [smem:[#allocation0]]
  $region18: #{tpu_custom_call.1} parent=0
    _
  %s4 = ssub.s32 1, %s2
  %s5 = scalar_select 0, %s4, %s2
  $region1: #{tpu_custom_call.1} parent=0
    #allocation2 [shape = 'u8[4096]{0}', space=vmem, size = 0x1000, scoped, tag = 'input window, operand 0, single buffered']
    #allocation3 [shape = 's32[1]{0}', space=sflag, size = 0x4, scoped, tag = 'scoped memory for tpu_custom_call.1']
    #allocation4 [shape = 's32[1]{0}', space=sflag, size = 0x4, scoped, tag = 'scoped memory for tpu_custom_call.1']
    #allocation5 [shape = 'u8[4096]{0}', space=vmem, size = 0x1000, scoped, tag = 'output window, operand 0, single buffered']
    %6 = vsyncpa [#allocation3], 0
    %7 = vsyncpa [#allocation4], 0
    // Predicated region
    $region2: #{tpu_custom_call.1} parent=1 // pred_check
      _
    $region3: #{tpu_custom_call.1} parent=1 // pred_check_branch
      %9 = sbr.rel (0) target = $region5
    $region4: #{tpu_custom_call.1} parent=1 // pred_region
      %s11 = ssub.s32 128, 128
      %12 = vsyncadd [#allocation3], %s11
      %s14 = sshll.u32 [#allocation2], 4
      %s15 = int_to_ptr.vmem [resolvable:$true] %s14
      %17 = dma.hbm_to_vmem [thread:$0]  %s0, 128, %s15, [#allocation3]
    $region5: #{tpu_custom_call.1} parent=1 // pred_fallthru
      _
    // Predicated region
    $region6: #{tpu_custom_call.1} parent=1 // pred_check
      _
    $region7: #{tpu_custom_call.1} parent=1 // pred_check_branch
      %19 = sbr.rel (0) target = $region9
    $region8: #{tpu_custom_call.1} parent=1 // pred_region
      %20 = dma.done [#allocation3], 128
    $region9: #{tpu_custom_call.1} parent=1 // pred_fallthru
      _
    %v21 = vld [vmem:[#allocation2] sm:$0xff]
    %22 = vrot.lane.b32.xlu0 %v21, 1
    %v23 = vpop.permute.xlu0 %22
    %24 = vst [vmem:[#allocation5] sm:$0xff] %v23
    // Predicated region
    $region10: #{tpu_custom_call.1} parent=1 // pred_check
      _
    $region11: #{tpu_custom_call.1} parent=1 // pred_check_branch
      %26 = sbr.rel (0) target = $region13
    $region12: #{tpu_custom_call.1} parent=1 // pred_region
      %s28 = ssub.s32 128, 128
      %29 = vsyncadd [#allocation4], %s28
      %s31 = sshll.u32 [#allocation5], 4
      %s32 = int_to_ptr.vmem [resolvable:$true] %s31
      %34 = dma.vmem_to_hbm [thread:$0]  %s32, 128, %s1, [#allocation4]
    $region13: #{tpu_custom_call.1} parent=1 // pred_fallthru
      _
    // Predicated region
    $region14: #{tpu_custom_call.1} parent=1 // pred_check
      _
    $region15: #{tpu_custom_call.1} parent=1 // pred_check_branch
      %36 = sbr.rel (0) target = $region17
    $region16: #{tpu_custom_call.1} parent=1 // pred_region
      %37 = dma.done [#allocation4], 128
    $region17: #{tpu_custom_call.1} parent=1 // pred_fallthru
      _
    %38 = vsyncpa [#allocation3], 1
    %39 = vsyncpa [#allocation4], 1

// kernel: tpu_custom_call.1
$region0: #{tpu_custom_call.1}
  #allocation0 [shape = 'u32[]', space=smem, size = 0x4, offset = 0x4, fixed_abs, tag = 'smem constant byte address 0x4 - core index']
  #allocation1 [shape = 'u32[144,128]{1,0:T(1,128)}', space=vmem, size = 0x12000, scoped, tag = 'internal scratch']
  #allocation13 [shape = 's32[]', space=sflag, size = 0x4, offset = 0, fixed_abs, tag = 'sflag constant byte address 0x0 - dummy sync flag']
  #allocation15 [shape = 's32[]', space=sflag, size = 0x4, offset = 0, fixed_abs, tag = 'sflag constant byte address 0x0 - dummy sync flag']
  #allocation17 [shape = 's32[]', space=sflag, size = 0x4, offset = 0, fixed_abs, tag = 'sflag constant byte address 0x0 - dummy sync flag']
  %s0 = inlined_call_operand.hbm [shape: f32[2,32,128], index: 0, kind: input, shape index: {}]
  %s1 = inlined_call_operand.hbm [shape: bf16[128,384], index: 1, kind: input, shape index: {}]
  %s2 = inlined_call_operand.vmem [shape: f32[1,128], index: 2, kind: input, shape index: {}]
  %s3 = inlined_call_operand.hbm [shape: f32[32,128], index: 3, kind: input, shape index: {}]
  %s4 = inlined_call_operand.hbm [shape: f32[32,128], index: 4, kind: input, shape index: {}]
  %s5 = inlined_call_operand.hbm [shape: bf16[2,4,32,32], index: 5, kind: output, shape index: {0}]
  %s6 = inlined_call_operand.hbm [shape: bf16[2,4,32,32], index: 6, kind: output, shape index: {1}]
  %s7 = inlined_call_operand.hbm [shape: bf16[2,4,32,32], index: 7, kind: output, shape index: {2}]
  %8 = xla_tuple %s5, %s6, %s7
  %s9 = sld [smem:[#allocation0]]
  $region85: #{tpu_custom_call.1} parent=0
    _
  %s11 = ssub.s32 1, %s9
  %s12 = scalar_select 0, %s11, %s9
  $region1: #{tpu_custom_call.1} parent=0
    #allocation2 [shape = 'u8[16384]{0}', space=vmem, size = 0x4000, scoped, tag = 'input window, operand 0']
    #allocation3 [shape = 's32[2]{0}', space=sflag, size = 0x8, scoped, tag = 'scoped memory for tpu_custom_call.1']
    #allocation4 [shape = 's32[2]{0}', space=sflag, size = 0x8, scoped, tag = 'scoped memory for tpu_custom_call.1']
    #allocation5 [shape = 'u8[98304]{0}', space=vmem, size = 0x18000, scoped, tag = 'input window, operand 1, single buffered']
    #allocation6 [shape = 's32[1]{0}', space=sflag, size = 0x4, scoped, tag = 'scoped memory for tpu_custom_call.1']
    #allocation7 [shape = 'u8[16384]{0}', space=vmem, size = 0x4000, scoped, tag = 'input window, operand 3']
    #allocation8 [shape = 'u8[16384]{0}', space=vmem, size = 0x4000, scoped, tag = 'input window, operand 4']
    #allocation9 [shape = 'u8[32768]{0}', space=vmem, size = 0x8000, scoped, tag = 'output window, operand 0']
    #allocation10 [shape = 'u8[32768]{0}', space=vmem, size = 0x8000, scoped, tag = 'output window, operand 1']
    #allocation11 [shape = 's32[2]{0}', space=sflag, size = 0x8, scoped, tag = 'scoped memory for tpu_custom_call.1']
    #allocation12 [shape = 'u8[32768]{0}', space=vmem, size = 0x8000, scoped, tag = 'output window, operand 2']
    %13 = vsyncpa [#allocation3], 0
    %s14 = scalar_lea.sflag [#allocation3], 1
    %15 = vsyncpa %s14, 0
    %16 = vsyncpa [#allocation6], 0
    %17 = vsyncpa [#allocation4], 0
    %s18 = scalar_lea.sflag [#allocation4], 1
    %19 = vsyncpa %s18, 0
    %20 = vsyncpa [#allocation11], 0
    %s21 = scalar_lea.sflag [#allocation11], 1
    %22 = vsyncpa %s21, 0
    loop: start=0, step=1, limit=6
    $region2: #{tpu_custom_call.1} parent=1 // loop_pre_header
      _
    $region3: #{tpu_custom_call.1} parent=1 // loop_header
      %s24 = sphi 0, %s28
      %p25 = scmp.ge.s32.totalorder %s24, 6
      %s31 = sphi 0, %s43
      %s32 = sphi 0, %s39
      %s33 = sphi 0, %s31
      %s34 = sphi 0, %s32
      %s35 = sphi 0, %s33
      %s36 = sphi 0, %s34
      %s48 = sphi 0, %s50
      %s51 = sphi 0, %s48
      %s52 = sphi 0, %s51
      %s68 = sphi 0, %s52
      %s72 = sphi 0, %s72
      %s74 = sphi 0, %s72
      %s75 = sphi 0, %s74
      %s89 = sphi 0, %s75
      %s93 = sphi 0, %s93
      %s95 = sphi 0, %s93
      %s96 = sphi 0, %s95
      %s110 = sphi 0, %s96
      %s116 = sphi 0, %s118
      %s119 = sphi 0, %s116
      %s120 = sphi 0, %s119
      %s136 = sphi 0, %s120
      %s142 = sphi 0, %s144
      %s145 = sphi 0, %s142
      %s146 = sphi 0, %s145
      %s162 = sphi 0, %s146
      %s170 = sphi 0, %s172
      %s173 = sphi 0, %s170
      %s174 = sphi 0, %s173
      %s190 = sphi 0, %s174
      %s198 = sphi 0, %s200
      %s201 = sphi 0, %s198
      %s202 = sphi 0, %s201
      %s218 = sphi 0, %s202
      %s226 = sphi 0, %s228
      %s229 = sphi 0, %s226
      %s230 = sphi 0, %s229
      %s246 = sphi 0, %s230
    $region4: #{tpu_custom_call.1} parent=1 // loop_header_branch
      %27 = sbr.rel (%p25) target = $region8
    $region5: #{tpu_custom_call.1} parent=1 // loop_body
      %s29 = ssub.s32 %s24, 1
      %s30 = ssub.s32 %s24, 2
      %s37 = sadd.s32 1, %s32
      %p38 = scmp.ge.s32.totalorder %s37, 2
      %s39 = scalar_select %p38, 0, %s37
      %s40 = sadd.s32 1, %s31
      %s41 = scalar_select %p38, %s40, %s31
      %p42 = scmp.ge.s32.totalorder %s41, 2
      %s43 = scalar_select %p42, 0, %s41
      %s44 = ssub.s32 %s31, %s43
      %s45 = ssub.s32 %s32, %s39
      %s46 = sor.u32 %s44, %s45
      %p47 = scmp.eq.s32.totalorder %s46, 0
      %s49 = sadd.s32 %s48, 1
      %s50 = scalar_select %p47, %s48, %s49
      %p53 = pneg %p47
      %p54 = scmp.eq.s32.totalorder %s24, 3
      %p55 = por %p53, %p54
      %p56 = scmp.ne.s32.totalorder %s48, %s51
      %p57 = scmp.eq.s32.totalorder %s24, 0
      %p58 = por %p56, %p57
      %p59 = scmp.ne.s32.totalorder %s48, %s51
      %p60 = scmp.eq.s32.totalorder %s29, 3
      %p61 = por %p59, %p60
      %p62 = scmp.ne.s32.totalorder %s51, %s52
      %p63 = scmp.eq.s32.totalorder %s29, 0
      %p64 = por %p62, %p63
      %p65 = scmp.ne.s32.totalorder %s51, %s52
      %p66 = scmp.eq.s32.totalorder %s30, 3
      %p67 = por %p65, %p66
      %p69 = scmp.ne.s32.totalorder %s52, %s68
      %p70 = scmp.eq.s32.totalorder %s30, 0
      %p71 = por %p69, %p70
      %s73 = sadd.s32 %s72, 1
      %p76 = scmp.eq.s32.totalorder %s24, 3
      %p77 = scmp.ne.s32.totalorder %s72, %s74
      %p78 = scmp.eq.s32.totalorder %s24, 0
      %p79 = por %p77, %p78
      %p80 = scmp.ne.s32.totalorder %s72, %s74
      %p81 = scmp.eq.s32.totalorder %s29, 3
      %p82 = por %p80, %p81
      %p83 = scmp.ne.s32.totalorder %s74, %s75
      %p84 = scmp.eq.s32.totalorder %s29, 0
      %p85 = por %p83, %p84
      %p86 = scmp.ne.s32.totalorder %s74, %s75
      %p87 = scmp.eq.s32.totalorder %s30, 3
      %p88 = por %p86, %p87
      %p90 = scmp.ne.s32.totalorder %s75, %s89
      %p91 = scmp.eq.s32.totalorder %s30, 0
      %p92 = por %p90, %p91
      %s94 = sadd.s32 %s93, 1
      %p97 = scmp.eq.s32.totalorder %s24, 3
      %p98 = scmp.ne.s32.totalorder %s93, %s95
      %p99 = scmp.eq.s32.totalorder %s24, 0
      %p100 = por %p98, %p99
      %p101 = scmp.ne.s32.totalorder %s93, %s95
      %p102 = scmp.eq.s32.totalorder %s29, 3
      %p103 = por %p101, %p102
      %p104 = scmp.ne.s32.totalorder %s95, %s96
      %p105 = scmp.eq.s32.totalorder %s29, 0
      %p106 = por %p104, %p105
      %p107 = scmp.ne.s32.totalorder %s95, %s96
      %p108 = scmp.eq.s32.totalorder %s30, 3
      %p109 = por %p107, %p108
      %p111 = scmp.ne.s32.totalorder %s96, %s110
      %p112 = scmp.eq.s32.totalorder %s30, 0
      %p113 = por %p111, %p112
      %s114 = ssub.s32 %s32, %s39
      %p115 = scmp.eq.s32.totalorder %s114, 0
      %s117 = sadd.s32 %s116, 1
      %s118 = scalar_select %p115, %s116, %s117
      %p121 = pneg %p115
      %p122 = scmp.eq.s32.totalorder %s24, 3
      %p123 = por %p121, %p122
      %p124 = scmp.ne.s32.totalorder %s116, %s119
      %p125 = scmp.eq.s32.totalorder %s24, 0
      %p126 = por %p124, %p125
      %p127 = scmp.ne.s32.totalorder %s116, %s119
      %p128 = scmp.eq.s32.totalorder %s29, 3
      %p129 = por %p127, %p128
      %p130 = scmp.ne.s32.totalorder %s119, %s120
      %p131 = scmp.eq.s32.totalorder %s29, 0
      %p132 = por %p130, %p131
      %p133 = scmp.ne.s32.totalorder %s119, %s120
      %p134 = scmp.eq.s32.totalorder %s30, 3
      %p135 = por %p133, %p134
      %p137 = scmp.ne.s32.totalorder %s120, %s136
      %p138 = scmp.eq.s32.totalorder %s30, 0
      %p139 = por %p137, %p138
      %s140 = ssub.s32 %s32, %s39
      %p141 = scmp.eq.s32.totalorder %s140, 0
      %s143 = sadd.s32 %s142, 1
      %s144 = scalar_select %p141, %s142, %s143
      %p147 = pneg %p141
      %p148 = scmp.eq.s32.totalorder %s24, 3
      %p149 = por %p147, %p148
      %p150 = scmp.ne.s32.totalorder %s142, %s145
      %p151 = scmp.eq.s32.totalorder %s24, 0
      %p152 = por %p150, %p151
      %p153 = scmp.ne.s32.totalorder %s142, %s145
      %p154 = scmp.eq.s32.totalorder %s29, 3
      %p155 = por %p153, %p154
      %p156 = scmp.ne.s32.totalorder %s145, %s146
      %p157 = scmp.eq.s32.totalorder %s29, 0
      %p158 = por %p156, %p157
      %p159 = scmp.ne.s32.totalorder %s145, %s146
      %p160 = scmp.eq.s32.totalorder %s30, 3
      %p161 = por %p159, %p160
      %p163 = scmp.ne.s32.totalorder %s146, %s162
      %p164 = scmp.eq.s32.totalorder %s30, 0
      %p165 = por %p163, %p164
      %s166 = ssub.s32 %s31, %s43
      %s167 = ssub.s32 %s32, %s39
      %s168 = sor.u32 %s166, %s167
      %p169 = scmp.eq.s32.totalorder %s168, 0
      %s171 = sadd.s32 %s170, 1
      %s172 = scalar_select %p169, %s170, %s171
      %p175 = pneg %p169
      %p176 = scmp.eq.s32.totalorder %s24, 3
      %p177 = por %p175, %p176
      %p178 = scmp.ne.s32.totalorder %s170, %s173
      %p179 = scmp.eq.s32.totalorder %s24, 0
      %p180 = por %p178, %p179
      %p181 = scmp.ne.s32.totalorder %s170, %s173
      %p182 = scmp.eq.s32.totalorder %s29, 3
      %p183 = por %p181, %p182
      %p184 = scmp.ne.s32.totalorder %s173, %s174
      %p185 = scmp.eq.s32.totalorder %s29, 0
      %p186 = por %p184, %p185
      %p187 = scmp.ne.s32.totalorder %s173, %s174
      %p188 = scmp.eq.s32.totalorder %s30, 3
      %p189 = por %p187, %p188
      %p191 = scmp.ne.s32.totalorder %s174, %s190
      %p192 = scmp.eq.s32.totalorder %s30, 0
      %p193 = por %p191, %p192
      %s194 = ssub.s32 %s31, %s43
      %s195 = ssub.s32 %s32, %s39
      %s196 = sor.u32 %s194, %s195
      %p197 = scmp.eq.s32.totalorder %s196, 0
      %s199 = sadd.s32 %s198, 1
      %s200 = scalar_select %p197, %s198, %s199
      %p203 = pneg %p197
      %p204 = scmp.eq.s32.totalorder %s24, 3
      %p205 = por %p203, %p204
      %p206 = scmp.ne.s32.totalorder %s198, %s201
      %p207 = scmp.eq.s32.totalorder %s24, 0
      %p208 = por %p206, %p207
      %p209 = scmp.ne.s32.totalorder %s198, %s201
      %p210 = scmp.eq.s32.totalorder %s29, 3
      %p211 = por %p209, %p210
      %p212 = scmp.ne.s32.totalorder %s201, %s202
      %p213 = scmp.eq.s32.totalorder %s29, 0
      %p214 = por %p212, %p213
      %p215 = scmp.ne.s32.totalorder %s201, %s202
      %p216 = scmp.eq.s32.totalorder %s30, 3
      %p217 = por %p215, %p216
      %p219 = scmp.ne.s32.totalorder %s202, %s218
      %p220 = scmp.eq.s32.totalorder %s30, 0
      %p221 = por %p219, %p220
      %s222 = ssub.s32 %s31, %s43
      %s223 = ssub.s32 %s32, %s39
      %s224 = sor.u32 %s222, %s223
      %p225 = scmp.eq.s32.totalorder %s224, 0
      %s227 = sadd.s32 %s226, 1
      %s228 = scalar_select %p225, %s226, %s227
      %p231 = pneg %p225
      %p232 = scmp.eq.s32.totalorder %s24, 3
      %p233 = por %p231, %p232
      %p234 = scmp.ne.s32.totalorder %s226, %s229
      %p235 = scmp.eq.s32.totalorder %s24, 0
      %p236 = por %p234, %p235
      %p237 = scmp.ne.s32.totalorder %s226, %s229
      %p238 = scmp.eq.s32.totalorder %s29, 3
      %p239 = por %p237, %p238
      %p240 = scmp.ne.s32.totalorder %s229, %s230
      %p241 = scmp.eq.s32.totalorder %s29, 0
      %p242 = por %p240, %p241
      %p243 = scmp.ne.s32.totalorder %s229, %s230
      %p244 = scmp.eq.s32.totalorder %s30, 3
      %p245 = por %p243, %p244
      %p247 = scmp.ne.s32.totalorder %s230, %s246
      %p248 = scmp.eq.s32.totalorder %s30, 0
      %p249 = por %p247, %p248
      %p250 = scmp.le.s32.totalorder 1, %s24
      %p251 = scmp.lt.s32.totalorder %s24, 5
      %p252 = pnand %p250, %p251
      %p253 = pneg %p252
      // Predicated region
      $region9: #{tpu_custom_call.1} parent=5 // pred_check
        _
      $region10: #{tpu_custom_call.1} parent=5 // pred_check_branch
        %255 = sbr.rel (%p252) target = $region12
      $region11: #{tpu_custom_call.1} parent=5 // pred_region
        %s256 = ssub.s32 %s24, 1
        // Predicated region
        $region13: #{tpu_custom_call.1} parent=11 // pred_check
          %p257 = pneg %p85
        $region14: #{tpu_custom_call.1} parent=11 // pred_check_branch
          %259 = sbr.rel (%p257) target = $region16
        $region15: #{tpu_custom_call.1} parent=11 // pred_region
          %s261 = ssub.s32 3072, 3072
          %262 = vsyncadd [#allocation6], %s261
          %s263 = sshll.u32 [#allocation5], 4
          %s264 = int_to_ptr.vmem [resolvable:$true] %s263
          %269 = dma.hbm_to_vmem [thread:$0]  %s1, 3072, %s264, [#allocation6], 192, 192, 12
        $region16: #{tpu_custom_call.1} parent=11 // pred_fallthru
          _
        // Predicated region
        $region17: #{tpu_custom_call.1} parent=11 // pred_check
          %p270 = pneg %p106
        $region18: #{tpu_custom_call.1} parent=11 // pred_check_branch
          %272 = sbr.rel (%p270) target = $region20
        $region19: #{tpu_custom_call.1} parent=11 // pred_region
          _
        $region20: #{tpu_custom_call.1} parent=11 // pred_fallthru
          _
      $region12: #{tpu_custom_call.1} parent=5 // pred_fallthru
        _
      %p273 = scmp.lt.s32.totalorder %s24, 4
      // Predicated region
      $region21: #{tpu_custom_call.1} parent=5 // pred_check
        %p274 = pneg %p273
      $region22: #{tpu_custom_call.1} parent=5 // pred_check_branch
        %276 = sbr.rel (%p274) target = $region24
      $region23: #{tpu_custom_call.1} parent=5 // pred_region
        // Predicated region
        $region25: #{tpu_custom_call.1} parent=23 // pred_check
          %p277 = pneg %p58
        $region26: #{tpu_custom_call.1} parent=23 // pred_check_branch
          %279 = sbr.rel (%p277) target = $region28
        $region27: #{tpu_custom_call.1} parent=23 // pred_region
          %s280 = sand.u32 %s24, 1
          %s281 = scalar_lea.sflag [#allocation3], %s280
          %s282 = sand.u32 %s48, 1
          %s283 = smul.addr %s282, 16
          %s284 = scalar_lea.vmem [#allocation2], %s283
          %s285 = smul.u32 2, %s32
          %s287 = ssub.s32 256, 256
          %288 = vsyncadd %s281, %s287
          %s289 = smul.addr %s31, 4
          %s290 = sadd.s32 %s285, %s289
          %s291 = smul.addr %s290, 128
          %s292 = scalar_lea.hbm %s0, %s291
          %s293 = sshll.u32 %s284, 4
          %s294 = int_to_ptr.vmem [resolvable:$true] %s293
          %299 = dma.hbm_to_vmem [thread:$0]  %s292, 256, %s294, %s281, 128, 128, 8
        $region28: #{tpu_custom_call.1} parent=23 // pred_fallthru
          _
        // Predicated region
        $region29: #{tpu_custom_call.1} parent=23 // pred_check
          %p300 = pneg %p126
        $region30: #{tpu_custom_call.1} parent=23 // pred_check_branch
          %302 = sbr.rel (%p300) target = $region32
        $region31: #{tpu_custom_call.1} parent=23 // pred_region
          %s303 = sand.u32 %s24, 1
          %s304 = scalar_lea.sflag [#allocation3], %s303
          %s305 = sand.u32 %s116, 1
          %s306 = smul.addr %s305, 16
          %s307 = scalar_lea.vmem [#allocation7], %s306
          %s308 = smul.u32 2, %s32
          %s310 = ssub.s32 256, 256
          %311 = vsyncadd %s304, %s310
          %s312 = smul.addr %s308, 128
          %s313 = scalar_lea.hbm %s3, %s312
          %s314 = sshll.u32 %s307, 4
          %s315 = int_to_ptr.vmem [resolvable:$true] %s314
          %320 = dma.hbm_to_vmem [thread:$0]  %s313, 256, %s315, %s304, 128, 128, 8
        $region32: #{tpu_custom_call.1} parent=23 // pred_fallthru
          _
        // Predicated region
        $region33: #{tpu_custom_call.1} parent=23 // pred_check
          %p321 = pneg %p152
        $region34: #{tpu_custom_call.1} parent=23 // pred_check_branch
          %323 = sbr.rel (%p321) target = $region36
        $region35: #{tpu_custom_call.1} parent=23 // pred_region
          %s324 = sand.u32 %s24, 1
          %s325 = scalar_lea.sflag [#allocation3], %s324
          %s326 = sand.u32 %s142, 1
          %s327 = smul.addr %s326, 16
          %s328 = scalar_lea.vmem [#allocation8], %s327
          %s329 = smul.u32 2, %s32
          %s331 = ssub.s32 256, 256
          %332 = vsyncadd %s325, %s331
          %s333 = smul.addr %s329, 128
          %s334 = scalar_lea.hbm %s4, %s333
          %s335 = sshll.u32 %s328, 4
          %s336 = int_to_ptr.vmem [resolvable:$true] %s335
          %341 = dma.hbm_to_vmem [thread:$0]  %s334, 256, %s336, %s325, 128, 128, 8
        $region36: #{tpu_custom_call.1} parent=23 // pred_fallthru
          _
      $region24: #{tpu_custom_call.1} parent=5 // pred_fallthru
        _
      %p342 = scmp.le.s32.totalorder 1, %s24
      %p343 = scmp.lt.s32.totalorder %s24, 5
      %p344 = pnand %p342, %p343
      %p345 = pneg %p344
      // Predicated region
      $region37: #{tpu_custom_call.1} parent=5 // pred_check
        _
      $region38: #{tpu_custom_call.1} parent=5 // pred_check_branch
        %347 = sbr.rel (%p344) target = $region40
      $region39: #{tpu_custom_call.1} parent=5 // pred_region
        %s348 = ssub.s32 %s24, 1
        %s349 = sand.u32 %s29, 1
        %s350 = scalar_lea.sflag [#allocation3], %s349
        %s351 = sand.u32 %s51, 1
        %s352 = smul.addr %s351, 16
        %s353 = scalar_lea.vmem [#allocation2], %s352
        // Predicated region
        $region41: #{tpu_custom_call.1} parent=39 // pred_check
          %p354 = pneg %p64
        $region42: #{tpu_custom_call.1} parent=39 // pred_check_branch
          %356 = sbr.rel (%p354) target = $region44
        $region43: #{tpu_custom_call.1} parent=39 // pred_region
          %357 = dma.done %s350, 256
        $region44: #{tpu_custom_call.1} parent=39 // pred_fallthru
          _
        // Predicated region
        $region45: #{tpu_custom_call.1} parent=39 // pred_check
          %p358 = pneg %p85
        $region46: #{tpu_custom_call.1} parent=39 // pred_check_branch
          %360 = sbr.rel (%p358) target = $region48
        $region47: #{tpu_custom_call.1} parent=39 // pred_region
          %361 = dma.done [#allocation6], 3072
        $region48: #{tpu_custom_call.1} parent=39 // pred_fallthru
          _
        %s362 = sand.u32 %s29, 1
        %s363 = scalar_lea.sflag [#allocation3], %s362
        %s364 = sand.u32 %s119, 1
        %s365 = smul.addr %s364, 16
        %s366 = scalar_lea.vmem [#allocation7], %s365
        // Predicated region
        $region49: #{tpu_custom_call.1} parent=39 // pred_check
          %p367 = pneg %p132
        $region50: #{tpu_custom_call.1} parent=39 // pred_check_branch
          %369 = sbr.rel (%p367) target = $region52
        $region51: #{tpu_custom_call.1} parent=39 // pred_region
          %370 = dma.done %s363, 256
        $region52: #{tpu_custom_call.1} parent=39 // pred_fallthru
          _
        %s371 = sand.u32 %s29, 1
        %s372 = scalar_lea.sflag [#allocation3], %s371
        %s373 = sand.u32 %s145, 1
        %s374 = smul.addr %s373, 16
        %s375 = scalar_lea.vmem [#allocation8], %s374
        // Predicated region
        $region53: #{tpu_custom_call.1} parent=39 // pred_check
          %p376 = pneg %p158
        $region54: #{tpu_custom_call.1} parent=39 // pred_check_branch
          %378 = sbr.rel (%p376) target = $region56
        $region55: #{tpu_custom_call.1} parent=39 // pred_region
          %379 = dma.done %s372, 256
        $region56: #{tpu_custom_call.1} parent=39 // pred_fallthru
          _
        %s380 = sand.u32 %s29, 1
        %s381 = scalar_lea.sflag [#allocation3], %s380
        %s382 = sand.u32 %s51, 1
        %s383 = smul.addr %s382, 16
        %s384 = scalar_lea.vmem [#allocation2], %s383
        %p385 = pneg %p64
        %p386 = pneg %p61
        %p387 = pneg %p85
        %p388 = pneg %p82
        %p389 = pneg %p106
        %p390 = pneg %p103
        %s391 = sand.u32 %s29, 1
        %s392 = scalar_lea.sflag [#allocation3], %s391
        %s393 = sand.u32 %s119, 1
        %s394 = smul.addr %s393, 16
        %s395 = scalar_lea.vmem [#allocation7], %s394
        %p396 = pneg %p132
        %p397 = pneg %p129
        %s398 = sand.u32 %s29, 1
        %s399 = scalar_lea.sflag [#allocation3], %s398
        %s400 = sand.u32 %s145, 1
        %s401 = smul.addr %s400, 16
        %s402 = scalar_lea.vmem [#allocation8], %s401
        %p403 = pneg %p158
        %p404 = pneg %p155
        %p405 = pneg %p186
        %p406 = pneg %p183
        %s407 = sand.u32 %s173, 1
        %s408 = scalar_lea.sflag [#allocation4], %s407
        %s409 = sand.u32 %s173, 1
        %s410 = smul.addr %s409, 32
        %s411 = scalar_lea.vmem [#allocation9], %s410
        %p412 = pneg %p214
        %p413 = pneg %p211
        %s414 = sand.u32 %s29, 1
        %s415 = scalar_lea.sflag [#allocation11], %s414
        %s416 = sand.u32 %s201, 1
        %s417 = smul.addr %s416, 32
        %s418 = scalar_lea.vmem [#allocation10], %s417
        %p419 = pneg %p242
        %p420 = pneg %p239
        %s421 = sand.u32 %s29, 1
        %s422 = scalar_lea.sflag [#allocation11], %s421
        %s423 = sand.u32 %s229, 1
        %s424 = smul.addr %s423, 32
        %s425 = scalar_lea.vmem [#allocation12], %s424
        %s426 = smul.u32 2, %s34
        %s427 = smul.u32 2, %s34
        %s428 = smul.u32 2, %s34
        %s429 = smul.u32 2, %s34
        %s430 = smul.u32 2, %s34
        %s431 = smul.u32 2, %s34
        %v433 = vld [vmem:[%s353] sm:$0xff]
        %v434 = vld [vmem:[%s353 + $0x8] sm:$0xff]
        %v435 = vmul.f32 %v433, %v433
        %v436 = vmul.f32 %v434, %v434
        %437 = vadd.xlane.f32.xlu0 %v435
        %v438 = vpop.xlane.xlu0 %437
        %439 = vadd.xlane.f32.xlu0 %v436
        %v440 = vpop.xlane.xlu0 %439
        %v441 = vrcp.pop 128.0
        %v442 = vmul.f32 %v438, %v441
        %v443 = vmul.f32 %v440, %v441
        %v444 = vadd.f32 %v442, 1e-05
        %v445 = vadd.f32 %v443, 1e-05
        %v446 = vrsqrt.pop %v444
        %v447 = vrsqrt.pop %v445
        %v448 = vmul.f32 %v433, %v446
        %v449 = vmul.f32 %v434, %v447
        %v450 = vld [vmem:[%s2] sm:$0x1]
        %v452 = vlaneseq
        %v453 = vshrl.u32 %v452, 7
        %v454 = vsub.s32 0, %v453
        %v455 = vrot.slane %v450, %v454
        %v457 = vmul.f32 %v448, %v455
        %v458 = vmul.f32 %v449, %v455
        %v459 = vpack.c.bf16 %v458, %v457
        %v460 = vld [vmem:[#allocation5] sm:$0xff]
        %v461 = vld [vmem:[#allocation5 + $0x8] sm:$0xf]
        %v462 = vld [vmem:[#allocation5 + $0xc] sm:$0xff]
        %v463 = vld [vmem:[#allocation5 + $0x14] sm:$0xf]
        %v464 = vld [vmem:[#allocation5 + $0x18] sm:$0xff]
        %v465 = vld [vmem:[#allocation5 + $0x20] sm:$0xf]
        %v466 = vld [vmem:[#allocation5 + $0x24] sm:$0xff]
        %v467 = vld [vmem:[#allocation5 + $0x2c] sm:$0xf]
        %v468 = vld [vmem:[#allocation5 + $0x30] sm:$0xff]
        %v469 = vld [vmem:[#allocation5 + $0x38] sm:$0xf]
        %v470 = vld [vmem:[#allocation5 + $0x3c] sm:$0xff]
        %v471 = vld [vmem:[#allocation5 + $0x44] sm:$0xf]
        %v472 = vld [vmem:[#allocation5 + $0x48] sm:$0xff]
        %v473 = vld [vmem:[#allocation5 + $0x50] sm:$0xf]
        %v474 = vld [vmem:[#allocation5 + $0x54] sm:$0xff]
        %v475 = vld [vmem:[#allocation5 + $0x5c] sm:$0xf]
        %v476 = vld [vmem:[#allocation5 + $0x60] sm:$0xff]
        %v477 = vld [vmem:[#allocation5 + $0x68] sm:$0xf]
        %v478 = vld [vmem:[#allocation5 + $0x6c] sm:$0xff]
        %v479 = vld [vmem:[#allocation5 + $0x74] sm:$0xf]
        %v480 = vld [vmem:[#allocation5 + $0x78] sm:$0xff]
        %v481 = vld [vmem:[#allocation5 + $0x80] sm:$0xf]
        %v482 = vld [vmem:[#allocation5 + $0x84] sm:$0xff]
        %v483 = vld [vmem:[#allocation5 + $0x8c] sm:$0xf]
        %v484 = vld [vmem:[#allocation5 + $0x90] sm:$0xff]
        %v485 = vld [vmem:[#allocation5 + $0x98] sm:$0xf]
        %v486 = vld [vmem:[#allocation5 + $0x9c] sm:$0xff]
        %v487 = vld [vmem:[#allocation5 + $0xa4] sm:$0xf]
        %v488 = vld [vmem:[#allocation5 + $0xa8] sm:$0xff]
        %v489 = vld [vmem:[#allocation5 + $0xb0] sm:$0xf]
        %v490 = vld [vmem:[#allocation5 + $0xb4] sm:$0xff]
        %v491 = vld [vmem:[#allocation5 + $0xbc] sm:$0xf]
        %v524 = vunpack.c.l.b16 %v460
        %v525 = vunpack.c.h.b16 %v460
        %v526 = vunpack.c.l.b16 %v461
        %v527 = vunpack.c.l.b16 %v462
        %v528 = vunpack.c.h.b16 %v462
        %v529 = vunpack.c.l.b16 %v463
        %v530 = vunpack.c.l.b16 %v464
        %v531 = vunpack.c.h.b16 %v464
        %v532 = vunpack.c.l.b16 %v465
        %v533 = vunpack.c.l.b16 %v466
        %v534 = vunpack.c.h.b16 %v466
        %v535 = vunpack.c.l.b16 %v467
        %v536 = vunpack.c.l.b16 %v468
        %v537 = vunpack.c.h.b16 %v468
        %v538 = vunpack.c.l.b16 %v469
        %v539 = vunpack.c.l.b16 %v470
        %v540 = vunpack.c.h.b16 %v470
        %v541 = vunpack.c.l.b16 %v471
        %v542 = vunpack.c.l.b16 %v472
        %v543 = vunpack.c.h.b16 %v472
        %v544 = vunpack.c.l.b16 %v473
        %v545 = vunpack.c.l.b16 %v474
        %v546 = vunpack.c.h.b16 %v474
        %v547 = vunpack.c.l.b16 %v475
        %v548 = vunpack.c.l.b16 %v476
        %v549 = vunpack.c.h.b16 %v476
        %v550 = vunpack.c.l.b16 %v477
        %v551 = vunpack.c.l.b16 %v478
        %v552 = vunpack.c.h.b16 %v478
        %v553 = vunpack.c.l.b16 %v479
        %v554 = vunpack.c.l.b16 %v480
        %v555 = vunpack.c.h.b16 %v480
        %v556 = vunpack.c.l.b16 %v481
        %v557 = vunpack.c.l.b16 %v482
        %v558 = vunpack.c.h.b16 %v482
        %v559 = vunpack.c.l.b16 %v483
        %v560 = vunpack.c.l.b16 %v484
        %v561 = vunpack.c.h.b16 %v484
        %v562 = vunpack.c.l.b16 %v485
        %v563 = vunpack.c.l.b16 %v486
        %v564 = vunpack.c.h.b16 %v486
        %v565 = vunpack.c.l.b16 %v487
        %v566 = vunpack.c.l.b16 %v488
        %v567 = vunpack.c.h.b16 %v488
        %v568 = vunpack.c.l.b16 %v489
        %v569 = vunpack.c.l.b16 %v490
        %v570 = vunpack.c.h.b16 %v490
        %v571 = vunpack.c.l.b16 %v491
        %v572 = vpack.c.b16 %v527, %v524
        %v573 = vpack.c.b16 %v528, %v525
        %v574 = vpack.c.b16 %v529, %v526
        %v575 = vpack.c.b16 %v533, %v530
        %v576 = vpack.c.b16 %v534, %v531
        %v577 = vpack.c.b16 %v535, %v532
        %v578 = vpack.c.b16 %v539, %v536
        %v579 = vpack.c.b16 %v540, %v537
        %v580 = vpack.c.b16 %v541, %v538
        %v581 = vpack.c.b16 %v545, %v542
        %v582 = vpack.c.b16 %v546, %v543
        %v583 = vpack.c.b16 %v547, %v544
        %v584 = vpack.c.b16 %v551, %v548
        %v585 = vpack.c.b16 %v552, %v549
        %v586 = vpack.c.b16 %v553, %v550
        %v587 = vpack.c.b16 %v557, %v554
        %v588 = vpack.c.b16 %v558, %v555
        %v589 = vpack.c.b16 %v559, %v556
        %v590 = vpack.c.b16 %v563, %v560
        %v591 = vpack.c.b16 %v564, %v561
        %v592 = vpack.c.b16 %v565, %v562
        %v593 = vpack.c.b16 %v569, %v566
        %v594 = vpack.c.b16 %v570, %v567
        %v595 = vpack.c.b16 %v571, %v568
        %620 = vmatprep.subr.bf16.mxu0 %v594
        %621 = vmatpush1.bf16.msra.mxu0 %v593
        %622 = vmatprep.subr.bf16.mxu0 %v591
        %623 = vmatpush1.bf16.msra.mxu0 %v590
        %624 = vmatprep.subr.bf16.mxu0 %v588
        %625 = vmatpush1.bf16.msra.mxu0 %v587
        %626 = vmatprep.subr.bf16.mxu0 %v585
        %627 = vmatpush1.bf16.msra.mxu0 %v584
        %628 = vmatprep.subr.bf16.mxu0 %v582
        %629 = vmatpush1.bf16.msra.mxu0 %v581
        %630 = vmatprep.subr.bf16.mxu0 %v579
        %631 = vmatpush1.bf16.msra.mxu0 %v578
        %632 = vmatprep.subr.bf16.mxu0 %v576
        %633 = vmatpush1.bf16.msra.mxu0 %v575
        %634 = vmatprep.subr.bf16.mxu0 %v573
        %635 = vmatpush1.bf16.msra.mxu0 %v572
        %636 = vmatprep.subr.bf16.mxu0 0
        %637 = vmatpush2.bf16.msra.mxu0 0
        %638 = vmatprep.subr.bf16.mxu0 0
        %639 = vmatpush2.bf16.msra.mxu0 0
        %640 = vmatprep.subr.bf16.mxu0 0
        %641 = vmatpush2.bf16.msra.mxu0 0
        %642 = vmatprep.subr.bf16.mxu0 0
        %643 = vmatpush2.bf16.msra.mxu0 0
        %644 = vmatprep.subr.bf16.mxu0 0
        %645 = vmatpush2.bf16.msra.mxu0 0
        %646 = vmatprep.subr.bf16.mxu0 0
        %647 = vmatpush2.bf16.msra.mxu0 0
        %648 = vmatprep.subr.bf16.mxu0 0
        %649 = vmatpush2.bf16.msra.mxu0 0
        %650 = vmatprep.subr.bf16.mxu0 0
        %651 = vmatpush2.bf16.msra.mxu0 0
        %652 = vmatprep.mubr.bf16.mxu0 0
        %653 = vmatmul.mubr.bf16.gmra.mxu0 %v459
        %v654 = vpop.f32.mrf.mxu0
        %v655 = vadd.f32 0.0, %v654
        %v656 = vpop.f32.mrf.mxu0
        %v657 = vadd.f32 0.0, %v656
        %v658 = vpop.f32.mrf.mxu0
        %v659 = vadd.f32 0.0, %v658
        %v660 = vpop.f32.mrf.mxu0
        %v661 = vadd.f32 0.0, %v660
        %662 = vdwg.mxu0
        %663 = vmatprep.subr.bf16.mxu0 0
        %664 = vmatpush1.bf16.msra.mxu0 %v595
        %665 = vmatprep.subr.bf16.mxu0 0
        %666 = vmatpush1.bf16.msra.mxu0 %v592
        %667 = vmatprep.subr.bf16.mxu0 0
        %668 = vmatpush1.bf16.msra.mxu0 %v589
        %669 = vmatprep.subr.bf16.mxu0 0
        %670 = vmatpush1.bf16.msra.mxu0 %v586
        %671 = vmatprep.subr.bf16.mxu0 0
        %672 = vmatpush1.bf16.msra.mxu0 %v583
        %673 = vmatprep.subr.bf16.mxu0 0
        %674 = vmatpush1.bf16.msra.mxu0 %v580
        %675 = vmatprep.subr.bf16.mxu0 0
        %676 = vmatpush1.bf16.msra.mxu0 %v577
        %677 = vmatprep.subr.bf16.mxu0 0
        %678 = vmatpush1.bf16.msra.mxu0 %v574
        %679 = vmatprep.subr.bf16.mxu0 0
        %680 = vmatpush2.bf16.msra.mxu0 0
        %681 = vmatprep.subr.bf16.mxu0 0
        %682 = vmatpush2.bf16.msra.mxu0 0
        %683 = vmatprep.subr.bf16.mxu0 0
        %684 = vmatpush2.bf16.msra.mxu0 0
        %685 = vmatprep.subr.bf16.mxu0 0
        %686 = vmatpush2.bf16.msra.mxu0 0
        %687 = vmatprep.subr.bf16.mxu0 0
        %688 = vmatpush2.bf16.msra.mxu0 0
        %689 = vmatprep.subr.bf16.mxu0 0
        %690 = vmatpush2.bf16.msra.mxu0 0
        %691 = vmatprep.subr.bf16.mxu0 0
        %692 = vmatpush2.bf16.msra.mxu0 0
        %693 = vmatprep.subr.bf16.mxu0 0
        %694 = vmatpush2.bf16.msra.mxu0 0
        %695 = vmatprep.mubr.bf16.mxu0 0
        %696 = vmatmul.mubr.bf16.gmra.mxu0 %v459
        %v697 = vpop.f32.mrf.mxu0
        %v698 = vadd.f32 0.0, %v697
        %v699 = vpop.f32.mrf.mxu0
        %v700 = vpop.f32.mrf.mxu0
        %v701 = vadd.f32 0.0, %v700
        %v702 = vpop.f32.mrf.mxu0
        %703 = vdwg.mxu0
        %v704 = vld [vmem:[%s366] sm:$0xff]
        %v705 = vld [vmem:[%s366 + $0x8] sm:$0xff]
        %v706 = vld [vmem:[%s375] sm:$0xff]
        %v707 = vld [vmem:[%s375 + $0x8] sm:$0xff]
        %v708 = vlaneseq
        %v709 = vand.u32 %v708, 127
        %vm710 = vcmp.lt.s32.totalorder %v709, 0
        %v711 = vsub.s32 0, %v709
        %v712 = vsel %vm710, %v711, %v709
        %v713 = vshrl.u32 %v712, 1
        %v714 = vand.u32 %v712, 1
        %v715 = vsub.s32 0, %v714
        %v716 = vsel %vm710, %v715, %v714
        %vm717 = vcmp.ne.s32.totalorder %v716, 0
        %vm718 = vcmp.lt.s32.totalorder %v716, 0
        %vm719 = vmand %vm718, %vm717
        %v720 = vadd.s32 %v716, 2
        %v721 = vsel %vm719, %v720, %v716
        %vm722 = vcmp.eq.s32.totalorder %v721, 0
        %v723 = vmul.f32 %v655, %v704
        %v724 = vmul.f32 %v659, %v705
        %727 = vrot.lane.b32.xlu0 %v655, 127
        %v728 = vpop.permute.xlu0 %727
        %729 = vrot.lane.b32.xlu0 %v659, 127
        %v730 = vpop.permute.xlu0 %729
        %733 = vrot.lane.b32.xlu0 %v655, 1
        %v734 = vpop.permute.xlu0 %733
        %735 = vrot.lane.b32.xlu0 %v659, 1
        %v736 = vpop.permute.xlu0 %735
        %v739 = vsel %vm722, %v728, %v734
        %v740 = vsel %vm722, %v730, %v736
        %v741 = vmul.f32 %v739, %v706
        %v742 = vmul.f32 %v740, %v707
        %v743 = vadd.f32 %v723, %v741
        %v744 = vadd.f32 %v724, %v742
        %v745 = vmul.f32 %v743, 0.17677669
        %v746 = vmul.f32 %v744, 0.17677669
        %v747 = vmul.f32 %v657, %v704
        %v748 = vmul.f32 %v661, %v705
        %751 = vrot.lane.b32.xlu0 %v657, 127
        %v752 = vpop.permute.xlu0 %751
        %753 = vrot.lane.b32.xlu0 %v661, 127
        %v754 = vpop.permute.xlu0 %753
        %757 = vrot.lane.b32.xlu0 %v657, 1
        %v758 = vpop.permute.xlu0 %757
        %759 = vrot.lane.b32.xlu0 %v661, 1
        %v760 = vpop.permute.xlu0 %759
        %v763 = vsel %vm722, %v752, %v758
        %v764 = vsel %vm722, %v754, %v760
        %v765 = vmul.f32 %v763, %v706
        %v766 = vmul.f32 %v764, %v707
        %v767 = vadd.f32 %v747, %v765
        %v768 = vadd.f32 %v748, %v766
        %v769 = vpack.c.bf16 %v746, %v745
        %v771 = vunpack.c.l.b16 %v769
        %v772 = vunpack.c.h.b16 %v769
        %v773 = vpack.c.b16 %v771, %v771
        %v774 = vpack.c.b16 %v772, %v772
        %vm777 = vcmask 257024
        %778 = vst.msk [vmem:[%s411] sm:$0xf] %vm777, %v773
        %779 = vst.msk [vmem:[%s411 + $0x4] sm:$0xf] %vm777, %v774
        %v780 = vpack.c.bf16 %v768, %v767
        %v782 = vunpack.c.l.b16 %v780
        %v783 = vunpack.c.h.b16 %v780
        %v784 = vpack.c.b16 %v782, %v782
        %v785 = vpack.c.b16 %v783, %v783
        %788 = vst.msk [vmem:[%s418] sm:$0xf] %vm777, %v784
        %789 = vst.msk [vmem:[%s418 + $0x4] sm:$0xf] %vm777, %v785
        %v790 = vpack.c.bf16 %v701, %v698
        %v792 = vunpack.c.l.b16 %v790
        %v793 = vunpack.c.h.b16 %v790
        %v794 = vpack.c.b16 %v792, %v792
        %v795 = vpack.c.b16 %v793, %v793
        %798 = vst.msk [vmem:[%s425] sm:$0xf] %vm777, %v794
        %799 = vst.msk [vmem:[%s425 + $0x4] sm:$0xf] %vm777, %v795
        %800 = vrot.lane.b32.xlu0 %v773, 96
        %v801 = vpop.permute.xlu0 %800
        %802 = vrot.lane.b32.xlu0 %v774, 96
        %v803 = vpop.permute.xlu0 %802
        %s806 = scalar_lea.vmem %s411, 8 [#allocation9]
        %807 = vst.msk [vmem:[%s806] sm:$0xf] %vm777, %v801
        %808 = vst.msk [vmem:[%s806 + $0x4] sm:$0xf] %vm777, %v803
        %809 = vrot.lane.b32.xlu0 %v784, 96
        %v810 = vpop.permute.xlu0 %809
        %811 = vrot.lane.b32.xlu0 %v785, 96
        %v812 = vpop.permute.xlu0 %811
        %s815 = scalar_lea.vmem %s418, 8 [#allocation10]
        %816 = vst.msk [vmem:[%s815] sm:$0xf] %vm777, %v810
        %817 = vst.msk [vmem:[%s815 + $0x4] sm:$0xf] %vm777, %v812
        %818 = vrot.lane.b32.xlu0 %v794, 96
        %v819 = vpop.permute.xlu0 %818
        %820 = vrot.lane.b32.xlu0 %v795, 96
        %v821 = vpop.permute.xlu0 %820
        %s824 = scalar_lea.vmem %s425, 8 [#allocation12]
        %825 = vst.msk [vmem:[%s824] sm:$0xf] %vm777, %v819
        %826 = vst.msk [vmem:[%s824 + $0x4] sm:$0xf] %vm777, %v821
        %827 = vrot.lane.b32.xlu0 %v773, 64
        %v828 = vpop.permute.xlu0 %827
        %829 = vrot.lane.b32.xlu0 %v774, 64
        %v830 = vpop.permute.xlu0 %829
        %s833 = scalar_lea.vmem %s411, 16 [#allocation9]
        %834 = vst.msk [vmem:[%s833] sm:$0xf] %vm777, %v828
        %835 = vst.msk [vmem:[%s833 + $0x4] sm:$0xf] %vm777, %v830
        %836 = vrot.lane.b32.xlu0 %v784, 64
        %v837 = vpop.permute.xlu0 %836
        %838 = vrot.lane.b32.xlu0 %v785, 64
        %v839 = vpop.permute.xlu0 %838
        %s842 = scalar_lea.vmem %s418, 16 [#allocation10]
        %843 = vst.msk [vmem:[%s842] sm:$0xf] %vm777, %v837
        %844 = vst.msk [vmem:[%s842 + $0x4] sm:$0xf] %vm777, %v839
        %845 = vrot.lane.b32.xlu0 %v794, 64
        %v846 = vpop.permute.xlu0 %845
        %847 = vrot.lane.b32.xlu0 %v795, 64
        %v848 = vpop.permute.xlu0 %847
        %s851 = scalar_lea.vmem %s425, 16 [#allocation12]
        %852 = vst.msk [vmem:[%s851] sm:$0xf] %vm777, %v846
        %853 = vst.msk [vmem:[%s851 + $0x4] sm:$0xf] %vm777, %v848
        %854 = vrot.lane.b32.xlu0 %v773, 32
        %v855 = vpop.permute.xlu0 %854
        %856 = vrot.lane.b32.xlu0 %v774, 32
        %v857 = vpop.permute.xlu0 %856
        %s860 = scalar_lea.vmem %s411, 24 [#allocation9]
        %861 = vst.msk [vmem:[%s860] sm:$0xf] %vm777, %v855
        %862 = vst.msk [vmem:[%s860 + $0x4] sm:$0xf] %vm777, %v857
        %863 = vrot.lane.b32.xlu0 %v784, 32
        %v864 = vpop.permute.xlu0 %863
        %865 = vrot.lane.b32.xlu0 %v785, 32
        %v866 = vpop.permute.xlu0 %865
        %s869 = scalar_lea.vmem %s418, 24 [#allocation10]
        %870 = vst.msk [vmem:[%s869] sm:$0xf] %vm777, %v864
        %871 = vst.msk [vmem:[%s869 + $0x4] sm:$0xf] %vm777, %v866
        %872 = vrot.lane.b32.xlu0 %v794, 32
        %v873 = vpop.permute.xlu0 %872
        %874 = vrot.lane.b32.xlu0 %v795, 32
        %v875 = vpop.permute.xlu0 %874
        %s878 = scalar_lea.vmem %s425, 24 [#allocation12]
        %879 = vst.msk [vmem:[%s878] sm:$0xf] %vm777, %v873
        %880 = vst.msk [vmem:[%s878 + $0x4] sm:$0xf] %vm777, %v875
        %s881 = sand.u32 %s173, 1
        %s882 = scalar_lea.sflag [#allocation4], %s881
        %s883 = sand.u32 %s173, 1
        %s884 = smul.addr %s883, 32
        %s885 = scalar_lea.vmem [#allocation9], %s884
        %s886 = sand.u32 %s29, 1
        %s887 = scalar_lea.sflag [#allocation11], %s886
        %s888 = sand.u32 %s201, 1
        %s889 = smul.addr %s888, 32
        %s890 = scalar_lea.vmem [#allocation10], %s889
        %s891 = sand.u32 %s29, 1
        %s892 = scalar_lea.sflag [#allocation11], %s891
        %s893 = sand.u32 %s229, 1
        %s894 = smul.addr %s893, 32
        %s895 = scalar_lea.vmem [#allocation12], %s894
        // Predicated region
        $region57: #{tpu_custom_call.1} parent=39 // pred_check
          %p896 = pneg %p183
        $region58: #{tpu_custom_call.1} parent=39 // pred_check_branch
          %898 = sbr.rel (%p896) target = $region60
        $region59: #{tpu_custom_call.1} parent=39 // pred_region
          #allocation14 [shape = 'u32[6]{0}', space=smem, size = 0x18, scoped, tag = 'DMA stride descriptor']
          %s899 = smul.u32 2, %s34
          %s901 = ssub.s32 512, 512
          %902 = vsyncadd %s882, %s901
          %s903 = smul.addr %s33, 16
          %s904 = sadd.s32 %s899, %s903
          %s905 = smul.addr %s904, 64
          %s906 = scalar_lea.hbm %s5, %s905
          %s908 = sshll.u32 1, 14
          %s909 = sxor.u32 4294967295, %s908
          %s912 = sshll.u32 7, 18
          %s913 = sxor.u32 4294967295, %s912
          %s914 = sand.u32 0, %s913
          %s916 = sor.u32 %s914, 0
          %s917 = sshll.u32 %s885, 4
          %s918 = int_to_ptr.vmem [resolvable:$true] %s917
          %924 = sst [smem:[#allocation14]] 128
          %s925 = scalar_lea.smem [#allocation14], 1
          %926 = sst [smem:[%s925]] 256
          %s927 = scalar_lea.smem [#allocation14], 2
          %928 = sst [smem:[%s927]] 2
          %s929 = scalar_lea.smem [#allocation14], 3
          %930 = sst [smem:[%s929]] 64
          %s931 = scalar_lea.smem [#allocation14], 4
          %932 = sst [smem:[%s931]] 64
          %s933 = scalar_lea.smem [#allocation14], 5
          %934 = sst [smem:[%s933]] 4
          %936 = dma.general %s918, 512, %s906, %s882, 131072, [#allocation14], %s916, 0
        $region60: #{tpu_custom_call.1} parent=39 // pred_fallthru
          _
        // Predicated region
        $region61: #{tpu_custom_call.1} parent=39 // pred_check
          %p937 = pneg %p211
        $region62: #{tpu_custom_call.1} parent=39 // pred_check_branch
          %939 = sbr.rel (%p937) target = $region64
        $region63: #{tpu_custom_call.1} parent=39 // pred_region
          #allocation16 [shape = 'u32[6]{0}', space=smem, size = 0x18, scoped, tag = 'DMA stride descriptor']
          %s940 = smul.u32 2, %s34
          %s942 = ssub.s32 512, 512
          %943 = vsyncadd %s887, %s942
          %s944 = smul.addr %s33, 16
          %s945 = sadd.s32 %s940, %s944
          %s946 = smul.addr %s945, 64
          %s947 = scalar_lea.hbm %s6, %s946
          %s949 = sshll.u32 1, 14
          %s950 = sxor.u32 4294967295, %s949
          %s953 = sshll.u32 7, 18
          %s954 = sxor.u32 4294967295, %s953
          %s955 = sand.u32 0, %s954
          %s957 = sor.u32 %s955, 0
          %s958 = sshll.u32 %s890, 4
          %s959 = int_to_ptr.vmem [resolvable:$true] %s958
          %965 = sst [smem:[#allocation16]] 128
          %s966 = scalar_lea.smem [#allocation16], 1
          %967 = sst [smem:[%s966]] 256
          %s968 = scalar_lea.smem [#allocation16], 2
          %969 = sst [smem:[%s968]] 2
          %s970 = scalar_lea.smem [#allocation16], 3
          %971 = sst [smem:[%s970]] 64
          %s972 = scalar_lea.smem [#allocation16], 4
          %973 = sst [smem:[%s972]] 64
          %s974 = scalar_lea.smem [#allocation16], 5
          %975 = sst [smem:[%s974]] 4
          %977 = dma.general %s959, 512, %s947, %s887, 131072, [#allocation16], %s957, 0
        $region64: #{tpu_custom_call.1} parent=39 // pred_fallthru
          _
        // Predicated region
        $region65: #{tpu_custom_call.1} parent=39 // pred_check
          %p978 = pneg %p239
        $region66: #{tpu_custom_call.1} parent=39 // pred_check_branch
          %980 = sbr.rel (%p978) target = $region68
        $region67: #{tpu_custom_call.1} parent=39 // pred_region
          #allocation18 [shape = 'u32[6]{0}', space=smem, size = 0x18, scoped, tag = 'DMA stride descriptor']
          %s981 = smul.u32 2, %s34
          %s983 = ssub.s32 512, 512
          %984 = vsyncadd %s892, %s983
          %s985 = smul.addr %s33, 16
          %s986 = sadd.s32 %s981, %s985
          %s987 = smul.addr %s986, 64
          %s988 = scalar_lea.hbm %s7, %s987
          %s990 = sshll.u32 1, 14
          %s991 = sxor.u32 4294967295, %s990
          %s994 = sshll.u32 7, 18
          %s995 = sxor.u32 4294967295, %s994
          %s996 = sand.u32 0, %s995
          %s998 = sor.u32 %s996, 0
          %s999 = sshll.u32 %s895, 4
          %s1000 = int_to_ptr.vmem [resolvable:$true] %s999
          %1006 = sst [smem:[#allocation18]] 128
          %s1007 = scalar_lea.smem [#allocation18], 1
          %1008 = sst [smem:[%s1007]] 256
          %s1009 = scalar_lea.smem [#allocation18], 2
          %1010 = sst [smem:[%s1009]] 2
          %s1011 = scalar_lea.smem [#allocation18], 3
          %1012 = sst [smem:[%s1011]] 64
          %s1013 = scalar_lea.smem [#allocation18], 4
          %1014 = sst [smem:[%s1013]] 64
          %s1015 = scalar_lea.smem [#allocation18], 5
          %1016 = sst [smem:[%s1015]] 4
          %1018 = dma.general %s1000, 512, %s988, %s892, 131072, [#allocation18], %s998, 0
        $region68: #{tpu_custom_call.1} parent=39 // pred_fallthru
          _
      $region40: #{tpu_custom_call.1} parent=5 // pred_fallthru
        _
      %p1019 = scmp.le.s32.totalorder 2, %s24
      // Predicated region
      $region69: #{tpu_custom_call.1} parent=5 // pred_check
        %p1020 = pneg %p1019
      $region70: #{tpu_custom_call.1} parent=5 // pred_check_branch
        %1022 = sbr.rel (%p1020) target = $region72
      $region71: #{tpu_custom_call.1} parent=5 // pred_region
        %s1023 = ssub.s32 %s24, 2
        // Predicated region
        $region73: #{tpu_custom_call.1} parent=71 // pred_check
          %p1024 = pneg %p189
        $region74: #{tpu_custom_call.1} parent=71 // pred_check_branch
          %1026 = sbr.rel (%p1024) target = $region76
        $region75: #{tpu_custom_call.1} parent=71 // pred_region
          %s1027 = sand.u32 %s174, 1
          %s1028 = scalar_lea.sflag [#allocation4], %s1027
          %s1029 = sand.u32 %s174, 1
          %s1030 = smul.addr %s1029, 32
          %s1031 = scalar_lea.vmem [#allocation9], %s1030
          %1032 = dma.done %s1028, 512
        $region76: #{tpu_custom_call.1} parent=71 // pred_fallthru
          _
        // Predicated region
        $region77: #{tpu_custom_call.1} parent=71 // pred_check
          %p1033 = pneg %p217
        $region78: #{tpu_custom_call.1} parent=71 // pred_check_branch
          %1035 = sbr.rel (%p1033) target = $region80
        $region79: #{tpu_custom_call.1} parent=71 // pred_region
          %s1036 = sand.u32 %s30, 1
          %s1037 = scalar_lea.sflag [#allocation11], %s1036
          %s1038 = sand.u32 %s202, 1
          %s1039 = smul.addr %s1038, 32
          %s1040 = scalar_lea.vmem [#allocation10], %s1039
          %1041 = dma.done %s1037, 512
        $region80: #{tpu_custom_call.1} parent=71 // pred_fallthru
          _
        // Predicated region
        $region81: #{tpu_custom_call.1} parent=71 // pred_check
          %p1042 = pneg %p245
        $region82: #{tpu_custom_call.1} parent=71 // pred_check_branch
          %1044 = sbr.rel (%p1042) target = $region84
        $region83: #{tpu_custom_call.1} parent=71 // pred_region
          %s1045 = sand.u32 %s30, 1
          %s1046 = scalar_lea.sflag [#allocation11], %s1045
          %s1047 = sand.u32 %s230, 1
          %s1048 = smul.addr %s1047, 32
          %s1049 = scalar_lea.vmem [#allocation12], %s1048
          %1050 = dma.done %s1046, 512
        $region84: #{tpu_custom_call.1} parent=71 // pred_fallthru
          _
      $region72: #{tpu_custom_call.1} parent=5 // pred_fallthru
        _
    $region6: #{tpu_custom_call.1} parent=1 // loop_footer
      %s28 = sadd.s32 1, %s24
    $region7: #{tpu_custom_call.1} parent=1 // loop_footer_branch
      %23 = sbr.rel target = $region3
    $region8: #{tpu_custom_call.1} parent=1 // loop_exit
      _
    %1051 = vsyncpa [#allocation3], 1
    %s1052 = scalar_lea.sflag [#allocation3], 1
    %1053 = vsyncpa %s1052, 1
    %1054 = vsyncpa [#allocation6], 1
    %1055 = vsyncpa [#allocation4], 1
    %s1056 = scalar_lea.sflag [#allocation4], 1
    %1057 = vsyncpa %s1056, 1
    %1058 = vsyncpa [#allocation11], 1
    %s1059 = scalar_lea.sflag [#allocation11], 1
    %1060 = vsyncpa %s1059, 1

// kernel: tpu_custom_call.1
$region0: #{tpu_custom_call.1}
  #allocation0 [shape = 'u32[]', space=smem, size = 0x4, offset = 0x4, fixed_abs, tag = 'smem constant byte address 0x4 - core index']
  #allocation1 [shape = 'u32[144,128]{1,0:T(1,128)}', space=vmem, size = 0x12000, scoped, tag = 'internal scratch']
  #allocation13 [shape = 's32[]', space=sflag, size = 0x4, offset = 0, fixed_abs, tag = 'sflag constant byte address 0x0 - dummy sync flag']
  #allocation15 [shape = 's32[]', space=sflag, size = 0x4, offset = 0, fixed_abs, tag = 'sflag constant byte address 0x0 - dummy sync flag']
  #allocation17 [shape = 's32[]', space=sflag, size = 0x4, offset = 0, fixed_abs, tag = 'sflag constant byte address 0x0 - dummy sync flag']
  %s0 = inlined_call_operand.hbm [shape: f32[2,32,128], index: 0, kind: input, shape index: {}]
  %s1 = inlined_call_operand.hbm [shape: bf16[128,384], index: 1, kind: input, shape index: {}]
  %s2 = inlined_call_operand.vmem [shape: f32[1,128], index: 2, kind: input, shape index: {}]
  %s3 = inlined_call_operand.hbm [shape: f32[32,128], index: 3, kind: input, shape index: {}]
  %s4 = inlined_call_operand.hbm [shape: f32[32,128], index: 4, kind: input, shape index: {}]
  %s5 = inlined_call_operand.hbm [shape: bf16[2,4,32,32], index: 5, kind: output, shape index: {0}]
  %s6 = inlined_call_operand.hbm [shape: bf16[2,4,32,32], index: 6, kind: output, shape index: {1}]
  %s7 = inlined_call_operand.hbm [shape: bf16[2,4,32,32], index: 7, kind: output, shape index: {2}]
  %8 = xla_tuple %s5, %s6, %s7
  %s9 = sld [smem:[#allocation0]]
  $region85: #{tpu_custom_call.1} parent=0
    _
  %s11 = ssub.s32 1, %s9
  %s12 = scalar_select 0, %s11, %s9
  $region1: #{tpu_custom_call.1} parent=0
    #allocation2 [shape = 'u8[16384]{0}', space=vmem, size = 0x4000, scoped, tag = 'input window, operand 0']
    #allocation3 [shape = 's32[2]{0}', space=sflag, size = 0x8, scoped, tag = 'scoped memory for tpu_custom_call.1']
    #allocation4 [shape = 's32[2]{0}', space=sflag, size = 0x8, scoped, tag = 'scoped memory for tpu_custom_call.1']
    #allocation5 [shape = 'u8[98304]{0}', space=vmem, size = 0x18000, scoped, tag = 'input window, operand 1, single buffered']
    #allocation6 [shape = 's32[1]{0}', space=sflag, size = 0x4, scoped, tag = 'scoped memory for tpu_custom_call.1']
    #allocation7 [shape = 'u8[16384]{0}', space=vmem, size = 0x4000, scoped, tag = 'input window, operand 3']
    #allocation8 [shape = 'u8[16384]{0}', space=vmem, size = 0x4000, scoped, tag = 'input window, operand 4']
    #allocation9 [shape = 'u8[32768]{0}', space=vmem, size = 0x8000, scoped, tag = 'output window, operand 0']
    #allocation10 [shape = 'u8[32768]{0}', space=vmem, size = 0x8000, scoped, tag = 'output window, operand 1']
    #allocation11 [shape = 's32[2]{0}', space=sflag, size = 0x8, scoped, tag = 'scoped memory for tpu_custom_call.1']
    #allocation12 [shape = 'u8[32768]{0}', space=vmem, size = 0x8000, scoped, tag = 'output window, operand 2']
    %13 = vsyncpa [#allocation3], 0
    %s14 = scalar_lea.sflag [#allocation3], 1
    %15 = vsyncpa %s14, 0
    %16 = vsyncpa [#allocation6], 0
    %17 = vsyncpa [#allocation4], 0
    %s18 = scalar_lea.sflag [#allocation4], 1
    %19 = vsyncpa %s18, 0
    %20 = vsyncpa [#allocation11], 0
    %s21 = scalar_lea.sflag [#allocation11], 1
    %22 = vsyncpa %s21, 0
    loop: start=0, step=1, limit=6
    $region2: #{tpu_custom_call.1} parent=1 // loop_pre_header
      _
    $region3: #{tpu_custom_call.1} parent=1 // loop_header
      %s24 = sphi 0, %s28
      %p25 = scmp.ge.s32.totalorder %s24, 6
      %s31 = sphi 0, %s43
      %s32 = sphi 0, %s39
      %s33 = sphi 0, %s31
      %s34 = sphi 0, %s32
      %s35 = sphi 0, %s33
      %s36 = sphi 0, %s34
      %s48 = sphi 0, %s50
      %s51 = sphi 0, %s48
      %s52 = sphi 0, %s51
      %s68 = sphi 0, %s52
      %s72 = sphi 0, %s72
      %s74 = sphi 0, %s72
      %s75 = sphi 0, %s74
      %s89 = sphi 0, %s75
      %s93 = sphi 0, %s93
      %s95 = sphi 0, %s93
      %s96 = sphi 0, %s95
      %s110 = sphi 0, %s96
      %s116 = sphi 0, %s118
      %s119 = sphi 0, %s116
      %s120 = sphi 0, %s119
      %s136 = sphi 0, %s120
      %s142 = sphi 0, %s144
      %s145 = sphi 0, %s142
      %s146 = sphi 0, %s145
      %s162 = sphi 0, %s146
      %s170 = sphi 0, %s172
      %s173 = sphi 0, %s170
      %s174 = sphi 0, %s173
      %s190 = sphi 0, %s174
      %s198 = sphi 0, %s200
      %s201 = sphi 0, %s198
      %s202 = sphi 0, %s201
      %s218 = sphi 0, %s202
      %s226 = sphi 0, %s228
      %s229 = sphi 0, %s226
      %s230 = sphi 0, %s229
      %s246 = sphi 0, %s230
    $region4: #{tpu_custom_call.1} parent=1 // loop_header_branch
      %27 = sbr.rel (%p25) target = $region8
    $region5: #{tpu_custom_call.1} parent=1 // loop_body
      %s29 = ssub.s32 %s24, 1
      %s30 = ssub.s32 %s24, 2
      %s37 = sadd.s32 1, %s32
      %p38 = scmp.ge.s32.totalorder %s37, 2
      %s39 = scalar_select %p38, 0, %s37
      %s40 = sadd.s32 1, %s31
      %s41 = scalar_select %p38, %s40, %s31
      %p42 = scmp.ge.s32.totalorder %s41, 2
      %s43 = scalar_select %p42, 0, %s41
      %s44 = ssub.s32 %s31, %s43
      %s45 = ssub.s32 %s32, %s39
      %s46 = sor.u32 %s44, %s45
      %p47 = scmp.eq.s32.totalorder %s46, 0
      %s49 = sadd.s32 %s48, 1
      %s50 = scalar_select %p47, %s48, %s49
      %p53 = pneg %p47
      %p54 = scmp.eq.s32.totalorder %s24, 3
      %p55 = por %p53, %p54
      %p56 = scmp.ne.s32.totalorder %s48, %s51
      %p57 = scmp.eq.s32.totalorder %s24, 0
      %p58 = por %p56, %p57
      %p59 = scmp.ne.s32.totalorder %s48, %s51
      %p60 = scmp.eq.s32.totalorder %s29, 3
      %p61 = por %p59, %p60
      %p62 = scmp.ne.s32.totalorder %s51, %s52
      %p63 = scmp.eq.s32.totalorder %s29, 0
      %p64 = por %p62, %p63
      %p65 = scmp.ne.s32.totalorder %s51, %s52
      %p66 = scmp.eq.s32.totalorder %s30, 3
      %p67 = por %p65, %p66
      %p69 = scmp.ne.s32.totalorder %s52, %s68
      %p70 = scmp.eq.s32.totalorder %s30, 0
      %p71 = por %p69, %p70
      %s73 = sadd.s32 %s72, 1
      %p76 = scmp.eq.s32.totalorder %s24, 3
      %p77 = scmp.ne.s32.totalorder %s72, %s74
      %p78 = scmp.eq.s32.totalorder %s24, 0
      %p79 = por %p77, %p78
      %p80 = scmp.ne.s32.totalorder %s72, %s74
      %p81 = scmp.eq.s32.totalorder %s29, 3
      %p82 = por %p80, %p81
      %p83 = scmp.ne.s32.totalorder %s74, %s75
      %p84 = scmp.eq.s32.totalorder %s29, 0
      %p85 = por %p83, %p84
      %p86 = scmp.ne.s32.totalorder %s74, %s75
      %p87 = scmp.eq.s32.totalorder %s30, 3
      %p88 = por %p86, %p87
      %p90 = scmp.ne.s32.totalorder %s75, %s89
      %p91 = scmp.eq.s32.totalorder %s30, 0
      %p92 = por %p90, %p91
      %s94 = sadd.s32 %s93, 1
      %p97 = scmp.eq.s32.totalorder %s24, 3
      %p98 = scmp.ne.s32.totalorder %s93, %s95
      %p99 = scmp.eq.s32.totalorder %s24, 0
      %p100 = por %p98, %p99
      %p101 = scmp.ne.s32.totalorder %s93, %s95
      %p102 = scmp.eq.s32.totalorder %s29, 3
      %p103 = por %p101, %p102
      %p104 = scmp.ne.s32.totalorder %s95, %s96
      %p105 = scmp.eq.s32.totalorder %s29, 0
      %p106 = por %p104, %p105
      %p107 = scmp.ne.s32.totalorder %s95, %s96
      %p108 = scmp.eq.s32.totalorder %s30, 3
      %p109 = por %p107, %p108
      %p111 = scmp.ne.s32.totalorder %s96, %s110
      %p112 = scmp.eq.s32.totalorder %s30, 0
      %p113 = por %p111, %p112
      %s114 = ssub.s32 %s32, %s39
      %p115 = scmp.eq.s32.totalorder %s114, 0
      %s117 = sadd.s32 %s116, 1
      %s118 = scalar_select %p115, %s116, %s117
      %p121 = pneg %p115
      %p122 = scmp.eq.s32.totalorder %s24, 3
      %p123 = por %p121, %p122
      %p124 = scmp.ne.s32.totalorder %s116, %s119
      %p125 = scmp.eq.s32.totalorder %s24, 0
      %p126 = por %p124, %p125
      %p127 = scmp.ne.s32.totalorder %s116, %s119
      %p128 = scmp.eq.s32.totalorder %s29, 3
      %p129 = por %p127, %p128
      %p130 = scmp.ne.s32.totalorder %s119, %s120
      %p131 = scmp.eq.s32.totalorder %s29, 0
      %p132 = por %p130, %p131
      %p133 = scmp.ne.s32.totalorder %s119, %s120
      %p134 = scmp.eq.s32.totalorder %s30, 3
      %p135 = por %p133, %p134
      %p137 = scmp.ne.s32.totalorder %s120, %s136
      %p138 = scmp.eq.s32.totalorder %s30, 0
      %p139 = por %p137, %p138
      %s140 = ssub.s32 %s32, %s39
      %p141 = scmp.eq.s32.totalorder %s140, 0
      %s143 = sadd.s32 %s142, 1
      %s144 = scalar_select %p141, %s142, %s143
      %p147 = pneg %p141
      %p148 = scmp.eq.s32.totalorder %s24, 3
      %p149 = por %p147, %p148
      %p150 = scmp.ne.s32.totalorder %s142, %s145
      %p151 = scmp.eq.s32.totalorder %s24, 0
      %p152 = por %p150, %p151
      %p153 = scmp.ne.s32.totalorder %s142, %s145
      %p154 = scmp.eq.s32.totalorder %s29, 3
      %p155 = por %p153, %p154
      %p156 = scmp.ne.s32.totalorder %s145, %s146
      %p157 = scmp.eq.s32.totalorder %s29, 0
      %p158 = por %p156, %p157
      %p159 = scmp.ne.s32.totalorder %s145, %s146
      %p160 = scmp.eq.s32.totalorder %s30, 3
      %p161 = por %p159, %p160
      %p163 = scmp.ne.s32.totalorder %s146, %s162
      %p164 = scmp.eq.s32.totalorder %s30, 0
      %p165 = por %p163, %p164
      %s166 = ssub.s32 %s31, %s43
      %s167 = ssub.s32 %s32, %s39
      %s168 = sor.u32 %s166, %s167
      %p169 = scmp.eq.s32.totalorder %s168, 0
      %s171 = sadd.s32 %s170, 1
      %s172 = scalar_select %p169, %s170, %s171
      %p175 = pneg %p169
      %p176 = scmp.eq.s32.totalorder %s24, 3
      %p177 = por %p175, %p176
      %p178 = scmp.ne.s32.totalorder %s170, %s173
      %p179 = scmp.eq.s32.totalorder %s24, 0
      %p180 = por %p178, %p179
      %p181 = scmp.ne.s32.totalorder %s170, %s173
      %p182 = scmp.eq.s32.totalorder %s29, 3
      %p183 = por %p181, %p182
      %p184 = scmp.ne.s32.totalorder %s173, %s174
      %p185 = scmp.eq.s32.totalorder %s29, 0
      %p186 = por %p184, %p185
      %p187 = scmp.ne.s32.totalorder %s173, %s174
      %p188 = scmp.eq.s32.totalorder %s30, 3
      %p189 = por %p187, %p188
      %p191 = scmp.ne.s32.totalorder %s174, %s190
      %p192 = scmp.eq.s32.totalorder %s30, 0
      %p193 = por %p191, %p192
      %s194 = ssub.s32 %s31, %s43
      %s195 = ssub.s32 %s32, %s39
      %s196 = sor.u32 %s194, %s195
      %p197 = scmp.eq.s32.totalorder %s196, 0
      %s199 = sadd.s32 %s198, 1
      %s200 = scalar_select %p197, %s198, %s199
      %p203 = pneg %p197
      %p204 = scmp.eq.s32.totalorder %s24, 3
      %p205 = por %p203, %p204
      %p206 = scmp.ne.s32.totalorder %s198, %s201
      %p207 = scmp.eq.s32.totalorder %s24, 0
      %p208 = por %p206, %p207
      %p209 = scmp.ne.s32.totalorder %s198, %s201
      %p210 = scmp.eq.s32.totalorder %s29, 3
      %p211 = por %p209, %p210
      %p212 = scmp.ne.s32.totalorder %s201, %s202
      %p213 = scmp.eq.s32.totalorder %s29, 0
      %p214 = por %p212, %p213
      %p215 = scmp.ne.s32.totalorder %s201, %s202
      %p216 = scmp.eq.s32.totalorder %s30, 3
      %p217 = por %p215, %p216
      %p219 = scmp.ne.s32.totalorder %s202, %s218
      %p220 = scmp.eq.s32.totalorder %s30, 0
      %p221 = por %p219, %p220
      %s222 = ssub.s32 %s31, %s43
      %s223 = ssub.s32 %s32, %s39
      %s224 = sor.u32 %s222, %s223
      %p225 = scmp.eq.s32.totalorder %s224, 0
      %s227 = sadd.s32 %s226, 1
      %s228 = scalar_select %p225, %s226, %s227
      %p231 = pneg %p225
      %p232 = scmp.eq.s32.totalorder %s24, 3
      %p233 = por %p231, %p232
      %p234 = scmp.ne.s32.totalorder %s226, %s229
      %p235 = scmp.eq.s32.totalorder %s24, 0
      %p236 = por %p234, %p235
      %p237 = scmp.ne.s32.totalorder %s226, %s229
      %p238 = scmp.eq.s32.totalorder %s29, 3
      %p239 = por %p237, %p238
      %p240 = scmp.ne.s32.totalorder %s229, %s230
      %p241 = scmp.eq.s32.totalorder %s29, 0
      %p242 = por %p240, %p241
      %p243 = scmp.ne.s32.totalorder %s229, %s230
      %p244 = scmp.eq.s32.totalorder %s30, 3
      %p245 = por %p243, %p244
      %p247 = scmp.ne.s32.totalorder %s230, %s246
      %p248 = scmp.eq.s32.totalorder %s30, 0
      %p249 = por %p247, %p248
      %p250 = scmp.le.s32.totalorder 1, %s24
      %p251 = scmp.lt.s32.totalorder %s24, 5
      %p252 = pnand %p250, %p251
      %p253 = pneg %p252
      // Predicated region
      $region9: #{tpu_custom_call.1} parent=5 // pred_check
        _
      $region10: #{tpu_custom_call.1} parent=5 // pred_check_branch
        %255 = sbr.rel (%p252) target = $region12
      $region11: #{tpu_custom_call.1} parent=5 // pred_region
        %s256 = ssub.s32 %s24, 1
        // Predicated region
        $region13: #{tpu_custom_call.1} parent=11 // pred_check
          %p257 = pneg %p85
        $region14: #{tpu_custom_call.1} parent=11 // pred_check_branch
          %259 = sbr.rel (%p257) target = $region16
        $region15: #{tpu_custom_call.1} parent=11 // pred_region
          %s261 = ssub.s32 3072, 3072
          %262 = vsyncadd [#allocation6], %s261
          %s263 = sshll.u32 [#allocation5], 4
          %s264 = int_to_ptr.vmem [resolvable:$true] %s263
          %269 = dma.hbm_to_vmem [thread:$0]  %s1, 3072, %s264, [#allocation6], 192, 192, 12
        $region16: #{tpu_custom_call.1} parent=11 // pred_fallthru
          _
        // Predicated region
        $region17: #{tpu_custom_call.1} parent=11 // pred_check
          %p270 = pneg %p106
        $region18: #{tpu_custom_call.1} parent=11 // pred_check_branch
          %272 = sbr.rel (%p270) target = $region20
        $region19: #{tpu_custom_call.1} parent=11 // pred_region
          _
        $region20: #{tpu_custom_call.1} parent=11 // pred_fallthru
          _
      $region12: #{tpu_custom_call.1} parent=5 // pred_fallthru
        _
      %p273 = scmp.lt.s32.totalorder %s24, 4
      // Predicated region
      $region21: #{tpu_custom_call.1} parent=5 // pred_check
        %p274 = pneg %p273
      $region22: #{tpu_custom_call.1} parent=5 // pred_check_branch
        %276 = sbr.rel (%p274) target = $region24
      $region23: #{tpu_custom_call.1} parent=5 // pred_region
        // Predicated region
        $region25: #{tpu_custom_call.1} parent=23 // pred_check
          %p277 = pneg %p58
        $region26: #{tpu_custom_call.1} parent=23 // pred_check_branch
          %279 = sbr.rel (%p277) target = $region28
        $region27: #{tpu_custom_call.1} parent=23 // pred_region
          %s280 = sand.u32 %s24, 1
          %s281 = scalar_lea.sflag [#allocation3], %s280
          %s282 = sand.u32 %s48, 1
          %s283 = smul.addr %s282, 16
          %s284 = scalar_lea.vmem [#allocation2], %s283
          %s285 = smul.u32 2, %s32
          %s287 = ssub.s32 256, 256
          %288 = vsyncadd %s281, %s287
          %s289 = smul.addr %s31, 4
          %s290 = sadd.s32 %s285, %s289
          %s291 = smul.addr %s290, 128
          %s292 = scalar_lea.hbm %s0, %s291
          %s293 = sshll.u32 %s284, 4
          %s294 = int_to_ptr.vmem [resolvable:$true] %s293
          %299 = dma.hbm_to_vmem [thread:$0]  %s292, 256, %s294, %s281, 128, 128, 8
        $region28: #{tpu_custom_call.1} parent=23 // pred_fallthru
          _
        // Predicated region
        $region29: #{tpu_custom_call.1} parent=23 // pred_check
          %p300 = pneg %p126
        $region30: #{tpu_custom_call.1} parent=23 // pred_check_branch
          %302 = sbr.rel (%p300) target = $region32
        $region31: #{tpu_custom_call.1} parent=23 // pred_region
          %s303 = sand.u32 %s24, 1
          %s304 = scalar_lea.sflag [#allocation3], %s303
          %s305 = sand.u32 %s116, 1
          %s306 = smul.addr %s305, 16
          %s307 = scalar_lea.vmem [#allocation7], %s306
          %s308 = smul.u32 2, %s32
          %s310 = ssub.s32 256, 256
          %311 = vsyncadd %s304, %s310
          %s312 = smul.addr %s308, 128
          %s313 = scalar_lea.hbm %s3, %s312
          %s314 = sshll.u32 %s307, 4
          %s315 = int_to_ptr.vmem [resolvable:$true] %s314
          %320 = dma.hbm_to_vmem [thread:$0]  %s313, 256, %s315, %s304, 128, 128, 8
        $region32: #{tpu_custom_call.1} parent=23 // pred_fallthru
          _
        // Predicated region
        $region33: #{tpu_custom_call.1} parent=23 // pred_check
          %p321 = pneg %p152
        $region34: #{tpu_custom_call.1} parent=23 // pred_check_branch
          %323 = sbr.rel (%p321) target = $region36
        $region35: #{tpu_custom_call.1} parent=23 // pred_region
          %s324 = sand.u32 %s24, 1
          %s325 = scalar_lea.sflag [#allocation3], %s324
          %s326 = sand.u32 %s142, 1
          %s327 = smul.addr %s326, 16
          %s328 = scalar_lea.vmem [#allocation8], %s327
          %s329 = smul.u32 2, %s32
          %s331 = ssub.s32 256, 256
          %332 = vsyncadd %s325, %s331
          %s333 = smul.addr %s329, 128
          %s334 = scalar_lea.hbm %s4, %s333
          %s335 = sshll.u32 %s328, 4
          %s336 = int_to_ptr.vmem [resolvable:$true] %s335
          %341 = dma.hbm_to_vmem [thread:$0]  %s334, 256, %s336, %s325, 128, 128, 8
        $region36: #{tpu_custom_call.1} parent=23 // pred_fallthru
          _
      $region24: #{tpu_custom_call.1} parent=5 // pred_fallthru
        _
      %p342 = scmp.le.s32.totalorder 1, %s24
      %p343 = scmp.lt.s32.totalorder %s24, 5
      %p344 = pnand %p342, %p343
      %p345 = pneg %p344
      // Predicated region
      $region37: #{tpu_custom_call.1} parent=5 // pred_check
        _
      $region38: #{tpu_custom_call.1} parent=5 // pred_check_branch
        %347 = sbr.rel (%p344) target = $region40
      $region39: #{tpu_custom_call.1} parent=5 // pred_region
        %s348 = ssub.s32 %s24, 1
        %s349 = sand.u32 %s29, 1
        %s350 = scalar_lea.sflag [#allocation3], %s349
        %s351 = sand.u32 %s51, 1
        %s352 = smul.addr %s351, 16
        %s353 = scalar_lea.vmem [#allocation2], %s352
        // Predicated region
        $region41: #{tpu_custom_call.1} parent=39 // pred_check
          %p354 = pneg %p64
        $region42: #{tpu_custom_call.1} parent=39 // pred_check_branch
          %356 = sbr.rel (%p354) target = $region44
        $region43: #{tpu_custom_call.1} parent=39 // pred_region
          %357 = dma.done %s350, 256
        $region44: #{tpu_custom_call.1} parent=39 // pred_fallthru
          _
        // Predicated region
        $region45: #{tpu_custom_call.1} parent=39 // pred_check
          %p358 = pneg %p85
        $region46: #{tpu_custom_call.1} parent=39 // pred_check_branch
          %360 = sbr.rel (%p358) target = $region48
        $region47: #{tpu_custom_call.1} parent=39 // pred_region
          %361 = dma.done [#allocation6], 3072
        $region48: #{tpu_custom_call.1} parent=39 // pred_fallthru
          _
        %s362 = sand.u32 %s29, 1
        %s363 = scalar_lea.sflag [#allocation3], %s362
        %s364 = sand.u32 %s119, 1
        %s365 = smul.addr %s364, 16
        %s366 = scalar_lea.vmem [#allocation7], %s365
        // Predicated region
        $region49: #{tpu_custom_call.1} parent=39 // pred_check
          %p367 = pneg %p132
        $region50: #{tpu_custom_call.1} parent=39 // pred_check_branch
          %369 = sbr.rel (%p367) target = $region52
        $region51: #{tpu_custom_call.1} parent=39 // pred_region
          %370 = dma.done %s363, 256
        $region52: #{tpu_custom_call.1} parent=39 // pred_fallthru
          _
        %s371 = sand.u32 %s29, 1
        %s372 = scalar_lea.sflag [#allocation3], %s371
        %s373 = sand.u32 %s145, 1
        %s374 = smul.addr %s373, 16
        %s375 = scalar_lea.vmem [#allocation8], %s374
        // Predicated region
        $region53: #{tpu_custom_call.1} parent=39 // pred_check
          %p376 = pneg %p158
        $region54: #{tpu_custom_call.1} parent=39 // pred_check_branch
          %378 = sbr.rel (%p376) target = $region56
        $region55: #{tpu_custom_call.1} parent=39 // pred_region
          %379 = dma.done %s372, 256
        $region56: #{tpu_custom_call.1} parent=39 // pred_fallthru
          _
        %s380 = sand.u32 %s29, 1
        %s381 = scalar_lea.sflag [#allocation3], %s380
        %s382 = sand.u32 %s51, 1
        %s383 = smul.addr %s382, 16
        %s384 = scalar_lea.vmem [#allocation2], %s383
        %p385 = pneg %p64
        %p386 = pneg %p61
        %p387 = pneg %p85
        %p388 = pneg %p82
        %p389 = pneg %p106
        %p390 = pneg %p103
        %s391 = sand.u32 %s29, 1
        %s392 = scalar_lea.sflag [#allocation3], %s391
        %s393 = sand.u32 %s119, 1
        %s394 = smul.addr %s393, 16
        %s395 = scalar_lea.vmem [#allocation7], %s394
        %p396 = pneg %p132
        %p397 = pneg %p129
        %s398 = sand.u32 %s29, 1
        %s399 = scalar_lea.sflag [#allocation3], %s398
        %s400 = sand.u32 %s145, 1
        %s401 = smul.addr %s400, 16
        %s402 = scalar_lea.vmem [#allocation8], %s401
        %p403 = pneg %p158
        %p404 = pneg %p155
        %p405 = pneg %p186
        %p406 = pneg %p183
        %s407 = sand.u32 %s173, 1
        %s408 = scalar_lea.sflag [#allocation4], %s407
        %s409 = sand.u32 %s173, 1
        %s410 = smul.addr %s409, 32
        %s411 = scalar_lea.vmem [#allocation9], %s410
        %p412 = pneg %p214
        %p413 = pneg %p211
        %s414 = sand.u32 %s29, 1
        %s415 = scalar_lea.sflag [#allocation11], %s414
        %s416 = sand.u32 %s201, 1
        %s417 = smul.addr %s416, 32
        %s418 = scalar_lea.vmem [#allocation10], %s417
        %p419 = pneg %p242
        %p420 = pneg %p239
        %s421 = sand.u32 %s29, 1
        %s422 = scalar_lea.sflag [#allocation11], %s421
        %s423 = sand.u32 %s229, 1
        %s424 = smul.addr %s423, 32
        %s425 = scalar_lea.vmem [#allocation12], %s424
        %s426 = smul.u32 2, %s34
        %s427 = smul.u32 2, %s34
        %s428 = smul.u32 2, %s34
        %s429 = smul.u32 2, %s34
        %s430 = smul.u32 2, %s34
        %s431 = smul.u32 2, %s34
        %v433 = vld [vmem:[%s353] sm:$0xff]
        %v434 = vld [vmem:[%s353 + $0x8] sm:$0xff]
        %v435 = vmul.f32 %v433, %v433
        %v436 = vmul.f32 %v434, %v434
        %437 = vadd.xlane.f32.xlu0 %v435
        %v438 = vpop.xlane.xlu0 %437
        %439 = vadd.xlane.f32.xlu0 %v436
        %v440 = vpop.xlane.xlu0 %439
        %v441 = vrcp.pop 128.0
        %v442 = vmul.f32 %v438, %v441
        %v443 = vmul.f32 %v440, %v441
        %v444 = vadd.f32 %v442, 1e-05
        %v445 = vadd.f32 %v443, 1e-05
        %v446 = vrsqrt.pop %v444
        %v447 = vrsqrt.pop %v445
        %v448 = vmul.f32 %v433, %v446
        %v449 = vmul.f32 %v434, %v447
        %v450 = vld [vmem:[%s2] sm:$0x1]
        %v452 = vlaneseq
        %v453 = vshrl.u32 %v452, 7
        %v454 = vsub.s32 0, %v453
        %v455 = vrot.slane %v450, %v454
        %v457 = vmul.f32 %v448, %v455
        %v458 = vmul.f32 %v449, %v455
        %v459 = vpack.c.bf16 %v458, %v457
        %v460 = vld [vmem:[#allocation5] sm:$0xff]
        %v461 = vld [vmem:[#allocation5 + $0x8] sm:$0xf]
        %v462 = vld [vmem:[#allocation5 + $0xc] sm:$0xff]
        %v463 = vld [vmem:[#allocation5 + $0x14] sm:$0xf]
        %v464 = vld [vmem:[#allocation5 + $0x18] sm:$0xff]
        %v465 = vld [vmem:[#allocation5 + $0x20] sm:$0xf]
        %v466 = vld [vmem:[#allocation5 + $0x24] sm:$0xff]
        %v467 = vld [vmem:[#allocation5 + $0x2c] sm:$0xf]
        %v468 = vld [vmem:[#allocation5 + $0x30] sm:$0xff]
        %v469 = vld [vmem:[#allocation5 + $0x38] sm:$0xf]
        %v470 = vld [vmem:[#allocation5 + $0x3c] sm:$0xff]
        %v471 = vld [vmem:[#allocation5 + $0x44] sm:$0xf]
        %v472 = vld [vmem:[#allocation5 + $0x48] sm:$0xff]
        %v473 = vld [vmem:[#allocation5 + $0x50] sm:$0xf]
        %v474 = vld [vmem:[#allocation5 + $0x54] sm:$0xff]
        %v475 = vld [vmem:[#allocation5 + $0x5c] sm:$0xf]
        %v476 = vld [vmem:[#allocation5 + $0x60] sm:$0xff]
        %v477 = vld [vmem:[#allocation5 + $0x68] sm:$0xf]
        %v478 = vld [vmem:[#allocation5 + $0x6c] sm:$0xff]
        %v479 = vld [vmem:[#allocation5 + $0x74] sm:$0xf]
        %v480 = vld [vmem:[#allocation5 + $0x78] sm:$0xff]
        %v481 = vld [vmem:[#allocation5 + $0x80] sm:$0xf]
        %v482 = vld [vmem:[#allocation5 + $0x84] sm:$0xff]
        %v483 = vld [vmem:[#allocation5 + $0x8c] sm:$0xf]
        %v484 = vld [vmem:[#allocation5 + $0x90] sm:$0xff]
        %v485 = vld [vmem:[#allocation5 + $0x98] sm:$0xf]
        %v486 = vld [vmem:[#allocation5 + $0x9c] sm:$0xff]
        %v487 = vld [vmem:[#allocation5 + $0xa4] sm:$0xf]
        %v488 = vld [vmem:[#allocation5 + $0xa8] sm:$0xff]
        %v489 = vld [vmem:[#allocation5 + $0xb0] sm:$0xf]
        %v490 = vld [vmem:[#allocation5 + $0xb4] sm:$0xff]
        %v491 = vld [vmem:[#allocation5 + $0xbc] sm:$0xf]
        %v524 = vunpack.c.l.b16 %v460
        %v525 = vunpack.c.h.b16 %v460
        %v526 = vunpack.c.l.b16 %v461
        %v527 = vunpack.c.l.b16 %v462
        %v528 = vunpack.c.h.b16 %v462
        %v529 = vunpack.c.l.b16 %v463
        %v530 = vunpack.c.l.b16 %v464
        %v531 = vunpack.c.h.b16 %v464
        %v532 = vunpack.c.l.b16 %v465
        %v533 = vunpack.c.l.b16 %v466
        %v534 = vunpack.c.h.b16 %v466
        %v535 = vunpack.c.l.b16 %v467
        %v536 = vunpack.c.l.b16 %v468
        %v537 = vunpack.c.h.b16 %v468
        %v538 = vunpack.c.l.b16 %v469
        %v539 = vunpack.c.l.b16 %v470
        %v540 = vunpack.c.h.b16 %v470
        %v541 = vunpack.c.l.b16 %v471
        %v542 = vunpack.c.l.b16 %v472
        %v543 = vunpack.c.h.b16 %v472
        %v544 = vunpack.c.l.b16 %v473
        %v545 = vunpack.c.l.b16 %v474
        %v546 = vunpack.c.h.b16 %v474
        %v547 = vunpack.c.l.b16 %v475
        %v548 = vunpack.c.l.b16 %v476
        %v549 = vunpack.c.h.b16 %v476
        %v550 = vunpack.c.l.b16 %v477
        %v551 = vunpack.c.l.b16 %v478
        %v552 = vunpack.c.h.b16 %v478
        %v553 = vunpack.c.l.b16 %v479
        %v554 = vunpack.c.l.b16 %v480
        %v555 = vunpack.c.h.b16 %v480
        %v556 = vunpack.c.l.b16 %v481
        %v557 = vunpack.c.l.b16 %v482
        %v558 = vunpack.c.h.b16 %v482
        %v559 = vunpack.c.l.b16 %v483
        %v560 = vunpack.c.l.b16 %v484
        %v561 = vunpack.c.h.b16 %v484
        %v562 = vunpack.c.l.b16 %v485
        %v563 = vunpack.c.l.b16 %v486
        %v564 = vunpack.c.h.b16 %v486
        %v565 = vunpack.c.l.b16 %v487
        %v566 = vunpack.c.l.b16 %v488
        %v567 = vunpack.c.h.b16 %v488
        %v568 = vunpack.c.l.b16 %v489
        %v569 = vunpack.c.l.b16 %v490
        %v570 = vunpack.c.h.b16 %v490
        %v571 = vunpack.c.l.b16 %v491
        %v572 = vpack.c.b16 %v527, %v524
        %v573 = vpack.c.b16 %v528, %v525
        %v574 = vpack.c.b16 %v529, %v526
        %v575 = vpack.c.b16 %v533, %v530
        %v576 = vpack.c.b16 %v534, %v531
        %v577 = vpack.c.b16 %v535, %v532
        %v578 = vpack.c.b16 %v539, %v536
        %v579 = vpack.c.b16 %v540, %v537
        %v580 = vpack.c.b16 %v541, %v538
        %v581 = vpack.c.b16 %v545, %v542
        %v582 = vpack.c.b16 %v546, %v543
        %v583 = vpack.c.b16 %v547, %v544
        %v584 = vpack.c.b16 %v551, %v548
        %v585 = vpack.c.b16 %v552, %v549
        %v586 = vpack.c.b16 %v553, %v550
        %v587 = vpack.c.b16 %v557, %v554
        %v588 = vpack.c.b16 %v558, %v555
        %v589 = vpack.c.b16 %v559, %v556
        %v590 = vpack.c.b16 %v563, %v560
        %v591 = vpack.c.b16 %v564, %v561
        %v592 = vpack.c.b16 %v565, %v562
        %v593 = vpack.c.b16 %v569, %v566
        %v594 = vpack.c.b16 %v570, %v567
        %v595 = vpack.c.b16 %v571, %v568
        %620 = vmatprep.subr.bf16.mxu0 %v594
        %621 = vmatpush1.bf16.msra.mxu0 %v593
        %622 = vmatprep.subr.bf16.mxu0 %v591
        %623 = vmatpush1.bf16.msra.mxu0 %v590
        %624 = vmatprep.subr.bf16.mxu0 %v588
        %625 = vmatpush1.bf16.msra.mxu0 %v587
        %626 = vmatprep.subr.bf16.mxu0 %v585
        %627 = vmatpush1.bf16.msra.mxu0 %v584
        %628 = vmatprep.subr.bf16.mxu0 %v582
        %629 = vmatpush1.bf16.msra.mxu0 %v581
        %630 = vmatprep.subr.bf16.mxu0 %v579
        %631 = vmatpush1.bf16.msra.mxu0 %v578
        %632 = vmatprep.subr.bf16.mxu0 %v576
        %633 = vmatpush1.bf16.msra.mxu0 %v575
        %634 = vmatprep.subr.bf16.mxu0 %v573
        %635 = vmatpush1.bf16.msra.mxu0 %v572
        %636 = vmatprep.subr.bf16.mxu0 0
        %637 = vmatpush2.bf16.msra.mxu0 0
        %638 = vmatprep.subr.bf16.mxu0 0
        %639 = vmatpush2.bf16.msra.mxu0 0
        %640 = vmatprep.subr.bf16.mxu0 0
        %641 = vmatpush2.bf16.msra.mxu0 0
        %642 = vmatprep.subr.bf16.mxu0 0
        %643 = vmatpush2.bf16.msra.mxu0 0
        %644 = vmatprep.subr.bf16.mxu0 0
        %645 = vmatpush2.bf16.msra.mxu0 0
        %646 = vmatprep.subr.bf16.mxu0 0
        %647 = vmatpush2.bf16.msra.mxu0 0
        %648 = vmatprep.subr.bf16.mxu0 0
        %649 = vmatpush2.bf16.msra.mxu0 0
        %650 = vmatprep.subr.bf16.mxu0 0
        %651 = vmatpush2.bf16.msra.mxu0 0
        %652 = vmatprep.mubr.bf16.mxu0 0
        %653 = vmatmul.mubr.bf16.gmra.mxu0 %v459
        %v654 = vpop.f32.mrf.mxu0
        %v655 = vadd.f32 0.0, %v654
        %v656 = vpop.f32.mrf.mxu0
        %v657 = vadd.f32 0.0, %v656
        %v658 = vpop.f32.mrf.mxu0
        %v659 = vadd.f32 0.0, %v658
        %v660 = vpop.f32.mrf.mxu0
        %v661 = vadd.f32 0.0, %v660
        %662 = vdwg.mxu0
        %663 = vmatprep.subr.bf16.mxu0 0
        %664 = vmatpush1.bf16.msra.mxu0 %v595
        %665 = vmatprep.subr.bf16.mxu0 0
        %666 = vmatpush1.bf16.msra.mxu0 %v592
        %667 = vmatprep.subr.bf16.mxu0 0
        %668 = vmatpush1.bf16.msra.mxu0 %v589
        %669 = vmatprep.subr.bf16.mxu0 0
        %670 = vmatpush1.bf16.msra.mxu0 %v586
        %671 = vmatprep.subr.bf16.mxu0 0
        %672 = vmatpush1.bf16.msra.mxu0 %v583
        %673 = vmatprep.subr.bf16.mxu0 0
        %674 = vmatpush1.bf16.msra.mxu0 %v580
        %675 = vmatprep.subr.bf16.mxu0 0
        %676 = vmatpush1.bf16.msra.mxu0 %v577
        %677 = vmatprep.subr.bf16.mxu0 0
        %678 = vmatpush1.bf16.msra.mxu0 %v574
        %679 = vmatprep.subr.bf16.mxu0 0
        %680 = vmatpush2.bf16.msra.mxu0 0
        %681 = vmatprep.subr.bf16.mxu0 0
        %682 = vmatpush2.bf16.msra.mxu0 0
        %683 = vmatprep.subr.bf16.mxu0 0
        %684 = vmatpush2.bf16.msra.mxu0 0
        %685 = vmatprep.subr.bf16.mxu0 0
        %686 = vmatpush2.bf16.msra.mxu0 0
        %687 = vmatprep.subr.bf16.mxu0 0
        %688 = vmatpush2.bf16.msra.mxu0 0
        %689 = vmatprep.subr.bf16.mxu0 0
        %690 = vmatpush2.bf16.msra.mxu0 0
        %691 = vmatprep.subr.bf16.mxu0 0
        %692 = vmatpush2.bf16.msra.mxu0 0
        %693 = vmatprep.subr.bf16.mxu0 0
        %694 = vmatpush2.bf16.msra.mxu0 0
        %695 = vmatprep.mubr.bf16.mxu0 0
        %696 = vmatmul.mubr.bf16.gmra.mxu0 %v459
        %v697 = vpop.f32.mrf.mxu0
        %v698 = vadd.f32 0.0, %v697
        %v699 = vpop.f32.mrf.mxu0
        %v700 = vpop.f32.mrf.mxu0
        %v701 = vadd.f32 0.0, %v700
        %v702 = vpop.f32.mrf.mxu0
        %703 = vdwg.mxu0
        %v704 = vld [vmem:[%s366] sm:$0xff]
        %v705 = vld [vmem:[%s366 + $0x8] sm:$0xff]
        %v706 = vld [vmem:[%s375] sm:$0xff]
        %v707 = vld [vmem:[%s375 + $0x8] sm:$0xff]
        %v708 = vlaneseq
        %v709 = vand.u32 %v708, 127
        %vm710 = vcmp.lt.s32.totalorder %v709, 0
        %v711 = vsub.s32 0, %v709
        %v712 = vsel %vm710, %v711, %v709
        %v713 = vshrl.u32 %v712, 1
        %v714 = vand.u32 %v712, 1
        %v715 = vsub.s32 0, %v714
        %v716 = vsel %vm710, %v715, %v714
        %vm717 = vcmp.ne.s32.totalorder %v716, 0
        %vm718 = vcmp.lt.s32.totalorder %v716, 0
        %vm719 = vmand %vm718, %vm717
        %v720 = vadd.s32 %v716, 2
        %v721 = vsel %vm719, %v720, %v716
        %vm722 = vcmp.eq.s32.totalorder %v721, 0
        %v723 = vmul.f32 %v655, %v704
        %v724 = vmul.f32 %v659, %v705
        %727 = vrot.lane.b32.xlu0 %v655, 127
        %v728 = vpop.permute.xlu0 %727
        %729 = vrot.lane.b32.xlu0 %v659, 127
        %v730 = vpop.permute.xlu0 %729
        %733 = vrot.lane.b32.xlu0 %v655, 1
        %v734 = vpop.permute.xlu0 %733
        %735 = vrot.lane.b32.xlu0 %v659, 1
        %v736 = vpop.permute.xlu0 %735
        %v739 = vsel %vm722, %v728, %v734
        %v740 = vsel %vm722, %v730, %v736
        %v741 = vmul.f32 %v739, %v706
        %v742 = vmul.f32 %v740, %v707
        %v743 = vadd.f32 %v723, %v741
        %v744 = vadd.f32 %v724, %v742
        %v745 = vmul.f32 %v743, 0.17677669
        %v746 = vmul.f32 %v744, 0.17677669
        %v747 = vmul.f32 %v657, %v704
        %v748 = vmul.f32 %v661, %v705
        %751 = vrot.lane.b32.xlu0 %v657, 127
        %v752 = vpop.permute.xlu0 %751
        %753 = vrot.lane.b32.xlu0 %v661, 127
        %v754 = vpop.permute.xlu0 %753
        %757 = vrot.lane.b32.xlu0 %v657, 1
        %v758 = vpop.permute.xlu0 %757
        %759 = vrot.lane.b32.xlu0 %v661, 1
        %v760 = vpop.permute.xlu0 %759
        %v763 = vsel %vm722, %v752, %v758
        %v764 = vsel %vm722, %v754, %v760
        %v765 = vmul.f32 %v763, %v706
        %v766 = vmul.f32 %v764, %v707
        %v767 = vadd.f32 %v747, %v765
        %v768 = vadd.f32 %v748, %v766
        %v769 = vpack.c.bf16 %v746, %v745
        %v771 = vunpack.c.l.b16 %v769
        %v772 = vunpack.c.h.b16 %v769
        %v773 = vpack.c.b16 %v771, %v771
        %v774 = vpack.c.b16 %v772, %v772
        %vm777 = vcmask 257024
        %778 = vst.msk [vmem:[%s411] sm:$0xf] %vm777, %v773
        %779 = vst.msk [vmem:[%s411 + $0x4] sm:$0xf] %vm777, %v774
        %v780 = vpack.c.bf16 %v768, %v767
        %v782 = vunpack.c.l.b16 %v780
        %v783 = vunpack.c.h.b16 %v780
        %v784 = vpack.c.b16 %v782, %v782
        %v785 = vpack.c.b16 %v783, %v783
        %788 = vst.msk [vmem:[%s418] sm:$0xf] %vm777, %v784
        %789 = vst.msk [vmem:[%s418 + $0x4] sm:$0xf] %vm777, %v785
        %v790 = vpack.c.bf16 %v701, %v698
        %v792 = vunpack.c.l.b16 %v790
        %v793 = vunpack.c.h.b16 %v790
        %v794 = vpack.c.b16 %v792, %v792
        %v795 = vpack.c.b16 %v793, %v793
        %798 = vst.msk [vmem:[%s425] sm:$0xf] %vm777, %v794
        %799 = vst.msk [vmem:[%s425 + $0x4] sm:$0xf] %vm777, %v795
        %800 = vrot.lane.b32.xlu0 %v773, 96
        %v801 = vpop.permute.xlu0 %800
        %802 = vrot.lane.b32.xlu0 %v774, 96
        %v803 = vpop.permute.xlu0 %802
        %s806 = scalar_lea.vmem %s411, 8 [#allocation9]
        %807 = vst.msk [vmem:[%s806] sm:$0xf] %vm777, %v801
        %808 = vst.msk [vmem:[%s806 + $0x4] sm:$0xf] %vm777, %v803
        %809 = vrot.lane.b32.xlu0 %v784, 96
        %v810 = vpop.permute.xlu0 %809
        %811 = vrot.lane.b32.xlu0 %v785, 96
        %v812 = vpop.permute.xlu0 %811
        %s815 = scalar_lea.vmem %s418, 8 [#allocation10]
        %816 = vst.msk [vmem:[%s815] sm:$0xf] %vm777, %v810
        %817 = vst.msk [vmem:[%s815 + $0x4] sm:$0xf] %vm777, %v812
        %818 = vrot.lane.b32.xlu0 %v794, 96
        %v819 = vpop.permute.xlu0 %818
        %820 = vrot.lane.b32.xlu0 %v795, 96
        %v821 = vpop.permute.xlu0 %820
        %s824 = scalar_lea.vmem %s425, 8 [#allocation12]
        %825 = vst.msk [vmem:[%s824] sm:$0xf] %vm777, %v819
        %826 = vst.msk [vmem:[%s824 + $0x4] sm:$0xf] %vm777, %v821
        %827 = vrot.lane.b32.xlu0 %v773, 64
        %v828 = vpop.permute.xlu0 %827
        %829 = vrot.lane.b32.xlu0 %v774, 64
        %v830 = vpop.permute.xlu0 %829
        %s833 = scalar_lea.vmem %s411, 16 [#allocation9]
        %834 = vst.msk [vmem:[%s833] sm:$0xf] %vm777, %v828
        %835 = vst.msk [vmem:[%s833 + $0x4] sm:$0xf] %vm777, %v830
        %836 = vrot.lane.b32.xlu0 %v784, 64
        %v837 = vpop.permute.xlu0 %836
        %838 = vrot.lane.b32.xlu0 %v785, 64
        %v839 = vpop.permute.xlu0 %838
        %s842 = scalar_lea.vmem %s418, 16 [#allocation10]
        %843 = vst.msk [vmem:[%s842] sm:$0xf] %vm777, %v837
        %844 = vst.msk [vmem:[%s842 + $0x4] sm:$0xf] %vm777, %v839
        %845 = vrot.lane.b32.xlu0 %v794, 64
        %v846 = vpop.permute.xlu0 %845
        %847 = vrot.lane.b32.xlu0 %v795, 64
        %v848 = vpop.permute.xlu0 %847
        %s851 = scalar_lea.vmem %s425, 16 [#allocation12]
        %852 = vst.msk [vmem:[%s851] sm:$0xf] %vm777, %v846
        %853 = vst.msk [vmem:[%s851 + $0x4] sm:$0xf] %vm777, %v848
        %854 = vrot.lane.b32.xlu0 %v773, 32
        %v855 = vpop.permute.xlu0 %854
        %856 = vrot.lane.b32.xlu0 %v774, 32
        %v857 = vpop.permute.xlu0 %856
        %s860 = scalar_lea.vmem %s411, 24 [#allocation9]
        %861 = vst.msk [vmem:[%s860] sm:$0xf] %vm777, %v855
        %862 = vst.msk [vmem:[%s860 + $0x4] sm:$0xf] %vm777, %v857
        %863 = vrot.lane.b32.xlu0 %v784, 32
        %v864 = vpop.permute.xlu0 %863
        %865 = vrot.lane.b32.xlu0 %v785, 32
        %v866 = vpop.permute.xlu0 %865
        %s869 = scalar_lea.vmem %s418, 24 [#allocation10]
        %870 = vst.msk [vmem:[%s869] sm:$0xf] %vm777, %v864
        %871 = vst.msk [vmem:[%s869 + $0x4] sm:$0xf] %vm777, %v866
        %872 = vrot.lane.b32.xlu0 %v794, 32
        %v873 = vpop.permute.xlu0 %872
        %874 = vrot.lane.b32.xlu0 %v795, 32
        %v875 = vpop.permute.xlu0 %874
        %s878 = scalar_lea.vmem %s425, 24 [#allocation12]
        %879 = vst.msk [vmem:[%s878] sm:$0xf] %vm777, %v873
        %880 = vst.msk [vmem:[%s878 + $0x4] sm:$0xf] %vm777, %v875
        %s881 = sand.u32 %s173, 1
        %s882 = scalar_lea.sflag [#allocation4], %s881
        %s883 = sand.u32 %s173, 1
        %s884 = smul.addr %s883, 32
        %s885 = scalar_lea.vmem [#allocation9], %s884
        %s886 = sand.u32 %s29, 1
        %s887 = scalar_lea.sflag [#allocation11], %s886
        %s888 = sand.u32 %s201, 1
        %s889 = smul.addr %s888, 32
        %s890 = scalar_lea.vmem [#allocation10], %s889
        %s891 = sand.u32 %s29, 1
        %s892 = scalar_lea.sflag [#allocation11], %s891
        %s893 = sand.u32 %s229, 1
        %s894 = smul.addr %s893, 32
        %s895 = scalar_lea.vmem [#allocation12], %s894
        // Predicated region
        $region57: #{tpu_custom_call.1} parent=39 // pred_check
          %p896 = pneg %p183
        $region58: #{tpu_custom_call.1} parent=39 // pred_check_branch
          %898 = sbr.rel (%p896) target = $region60
        $region59: #{tpu_custom_call.1} parent=39 // pred_region
          #allocation14 [shape = 'u32[6]{0}', space=smem, size = 0x18, scoped, tag = 'DMA stride descriptor']
          %s899 = smul.u32 2, %s34
          %s901 = ssub.s32 512, 512
          %902 = vsyncadd %s882, %s901
          %s903 = smul.addr %s33, 16
          %s904 = sadd.s32 %s899, %s903
          %s905 = smul.addr %s904, 64
          %s906 = scalar_lea.hbm %s5, %s905
          %s908 = sshll.u32 1, 14
          %s909 = sxor.u32 4294967295, %s908
          %s912 = sshll.u32 7, 18
          %s913 = sxor.u32 4294967295, %s912
          %s914 = sand.u32 0, %s913
          %s916 = sor.u32 %s914, 0
          %s917 = sshll.u32 %s885, 4
          %s918 = int_to_ptr.vmem [resolvable:$true] %s917
          %924 = sst [smem:[#allocation14]] 128
          %s925 = scalar_lea.smem [#allocation14], 1
          %926 = sst [smem:[%s925]] 256
          %s927 = scalar_lea.smem [#allocation14], 2
          %928 = sst [smem:[%s927]] 2
          %s929 = scalar_lea.smem [#allocation14], 3
          %930 = sst [smem:[%s929]] 64
          %s931 = scalar_lea.smem [#allocation14], 4
          %932 = sst [smem:[%s931]] 64
          %s933 = scalar_lea.smem [#allocation14], 5
          %934 = sst [smem:[%s933]] 4
          %936 = dma.general %s918, 512, %s906, %s882, 131072, [#allocation14], %s916, 0
        $region60: #{tpu_custom_call.1} parent=39 // pred_fallthru
          _
        // Predicated region
        $region61: #{tpu_custom_call.1} parent=39 // pred_check
          %p937 = pneg %p211
        $region62: #{tpu_custom_call.1} parent=39 // pred_check_branch
          %939 = sbr.rel (%p937) target = $region64
        $region63: #{tpu_custom_call.1} parent=39 // pred_region
          #allocation16 [shape = 'u32[6]{0}', space=smem, size = 0x18, scoped, tag = 'DMA stride descriptor']
          %s940 = smul.u32 2, %s34
          %s942 = ssub.s32 512, 512
          %943 = vsyncadd %s887, %s942
          %s944 = smul.addr %s33, 16
          %s945 = sadd.s32 %s940, %s944
          %s946 = smul.addr %s945, 64
          %s947 = scalar_lea.hbm %s6, %s946
          %s949 = sshll.u32 1, 14
          %s950 = sxor.u32 4294967295, %s949
          %s953 = sshll.u32 7, 18
          %s954 = sxor.u32 4294967295, %s953
          %s955 = sand.u32 0, %s954
          %s957 = sor.u32 %s955, 0
          %s958 = sshll.u32 %s890, 4
          %s959 = int_to_ptr.vmem [resolvable:$true] %s958
          %965 = sst [smem:[#allocation16]] 128
          %s966 = scalar_lea.smem [#allocation16], 1
          %967 = sst [smem:[%s966]] 256
          %s968 = scalar_lea.smem [#allocation16], 2
          %969 = sst [smem:[%s968]] 2
          %s970 = scalar_lea.smem [#allocation16], 3
          %971 = sst [smem:[%s970]] 64
          %s972 = scalar_lea.smem [#allocation16], 4
          %973 = sst [smem:[%s972]] 64
          %s974 = scalar_lea.smem [#allocation16], 5
          %975 = sst [smem:[%s974]] 4
          %977 = dma.general %s959, 512, %s947, %s887, 131072, [#allocation16], %s957, 0
        $region64: #{tpu_custom_call.1} parent=39 // pred_fallthru
          _
        // Predicated region
        $region65: #{tpu_custom_call.1} parent=39 // pred_check
          %p978 = pneg %p239
        $region66: #{tpu_custom_call.1} parent=39 // pred_check_branch
          %980 = sbr.rel (%p978) target = $region68
        $region67: #{tpu_custom_call.1} parent=39 // pred_region
          #allocation18 [shape = 'u32[6]{0}', space=smem, size = 0x18, scoped, tag = 'DMA stride descriptor']
          %s981 = smul.u32 2, %s34
          %s983 = ssub.s32 512, 512
          %984 = vsyncadd %s892, %s983
          %s985 = smul.addr %s33, 16
          %s986 = sadd.s32 %s981, %s985
          %s987 = smul.addr %s986, 64
          %s988 = scalar_lea.hbm %s7, %s987
          %s990 = sshll.u32 1, 14
          %s991 = sxor.u32 4294967295, %s990
          %s994 = sshll.u32 7, 18
          %s995 = sxor.u32 4294967295, %s994
          %s996 = sand.u32 0, %s995
          %s998 = sor.u32 %s996, 0
          %s999 = sshll.u32 %s895, 4
          %s1000 = int_to_ptr.vmem [resolvable:$true] %s999
          %1006 = sst [smem:[#allocation18]] 128
          %s1007 = scalar_lea.smem [#allocation18], 1
          %1008 = sst [smem:[%s1007]] 256
          %s1009 = scalar_lea.smem [#allocation18], 2
          %1010 = sst [smem:[%s1009]] 2
          %s1011 = scalar_lea.smem [#allocation18], 3
          %1012 = sst [smem:[%s1011]] 64
          %s1013 = scalar_lea.smem [#allocation18], 4
          %1014 = sst [smem:[%s1013]] 64
          %s1015 = scalar_lea.smem [#allocation18], 5
          %1016 = sst [smem:[%s1015]] 4
          %1018 = dma.general %s1000, 512, %s988, %s892, 131072, [#allocation18], %s998, 0
        $region68: #{tpu_custom_call.1} parent=39 // pred_fallthru
          _
      $region40: #{tpu_custom_call.1} parent=5 // pred_fallthru
        _
      %p1019 = scmp.le.s32.totalorder 2, %s24
      // Predicated region
      $region69: #{tpu_custom_call.1} parent=5 // pred_check
        %p1020 = pneg %p1019
      $region70: #{tpu_custom_call.1} parent=5 // pred_check_branch
        %1022 = sbr.rel (%p1020) target = $region72
      $region71: #{tpu_custom_call.1} parent=5 // pred_region
        %s1023 = ssub.s32 %s24, 2
        // Predicated region
        $region73: #{tpu_custom_call.1} parent=71 // pred_check
          %p1024 = pneg %p189
        $region74: #{tpu_custom_call.1} parent=71 // pred_check_branch
          %1026 = sbr.rel (%p1024) target = $region76
        $region75: #{tpu_custom_call.1} parent=71 // pred_region
          %s1027 = sand.u32 %s174, 1
          %s1028 = scalar_lea.sflag [#allocation4], %s1027
          %s1029 = sand.u32 %s174, 1
          %s1030 = smul.addr %s1029, 32
          %s1031 = scalar_lea.vmem [#allocation9], %s1030
          %1032 = dma.done %s1028, 512
        $region76: #{tpu_custom_call.1} parent=71 // pred_fallthru
          _
        // Predicated region
        $region77: #{tpu_custom_call.1} parent=71 // pred_check
          %p1033 = pneg %p217
        $region78: #{tpu_custom_call.1} parent=71 // pred_check_branch
          %1035 = sbr.rel (%p1033) target = $region80
        $region79: #{tpu_custom_call.1} parent=71 // pred_region
          %s1036 = sand.u32 %s30, 1
          %s1037 = scalar_lea.sflag [#allocation11], %s1036
          %s1038 = sand.u32 %s202, 1
          %s1039 = smul.addr %s1038, 32
          %s1040 = scalar_lea.vmem [#allocation10], %s1039
          %1041 = dma.done %s1037, 512
        $region80: #{tpu_custom_call.1} parent=71 // pred_fallthru
          _
        // Predicated region
        $region81: #{tpu_custom_call.1} parent=71 // pred_check
          %p1042 = pneg %p245
        $region82: #{tpu_custom_call.1} parent=71 // pred_check_branch
          %1044 = sbr.rel (%p1042) target = $region84
        $region83: #{tpu_custom_call.1} parent=71 // pred_region
          %s1045 = sand.u32 %s30, 1
          %s1046 = scalar_lea.sflag [#allocation11], %s1045
          %s1047 = sand.u32 %s230, 1
          %s1048 = smul.addr %s1047, 32
          %s1049 = scalar_lea.vmem [#allocation12], %s1048
          %1050 = dma.done %s1046, 512
        $region84: #{tpu_custom_call.1} parent=71 // pred_fallthru
          _
      $region72: #{tpu_custom_call.1} parent=5 // pred_fallthru
        _
    $region6: #{tpu_custom_call.1} parent=1 // loop_footer
      %s28 = sadd.s32 1, %s24
    $region7: #{tpu_custom_call.1} parent=1 // loop_footer_branch
      %23 = sbr.rel target = $region3
    $region8: #{tpu_custom_call.1} parent=1 // loop_exit
      _
    %1051 = vsyncpa [#allocation3], 1
    %s1052 = scalar_lea.sflag [#allocation3], 1
    %1053 = vsyncpa %s1052, 1
    %1054 = vsyncpa [#allocation6], 1
    %1055 = vsyncpa [#allocation4], 1
    %s1056 = scalar_lea.sflag [#allocation4], 1
    %1057 = vsyncpa %s1056, 1
    %1058 = vsyncpa [#allocation11], 1
    %s1059 = scalar_lea.sflag [#allocation11], 1
    %1060 = vsyncpa %s1059, 1

</llo_original>
